<compile_context>
chip_gen: v6e
topology: v6e:2x2x1
jax: 0.10.0
libtpu: 0.0.40
codegen_flags: <defaults>
</compile_context>

<pallas_src>
import jax
import jax.numpy as jnp
from jax.experimental import pallas as pl
from jax.experimental.pallas import tpu as pltpu

INPUT_SIZE = 512
HIDDEN = 256
NUM_CLASSES = 2


def _round_up(a, b):
    return ((a + b - 1) // b) * b


def _disc_kernel(x_ref, w0_ref, b0_ref, w1_ref, b1_ref, o_ref):
    # fc0: cast activations to bf16 in VMEM (no extra HBM pass); MXU, f32 acc.
    x = x_ref[...].astype(jnp.bfloat16)
    h = jnp.dot(x, w0_ref[...], preferred_element_type=jnp.float32)
    # Bias add + ReLU epilogue in f32 (native on v5e's VPU as well).
    h = jnp.maximum(h + b0_ref[...], 0.0)
    # fc1: bf16 MXU operands, f32 accumulation, f32 logits (only 2 lanes wide).
    o = jnp.dot(h.astype(jnp.bfloat16), w1_ref[...],
                preferred_element_type=jnp.float32)
    o_ref[...] = (o + b1_ref[...]).astype(o_ref.dtype)


def discriminator_forward(x, w0, b0, w1, b1, *, batch_tile=1024):
    """x: [N, INPUT_SIZE] (any N, any float dtype) -> logits: [N, NUM_CLASSES] f32."""
    n, d = x.shape
    assert d == w0.shape[0]
    hid = w0.shape[1]
    assert hid == w1.shape[0]
    c = w1.shape[1]

    # --- small, one-time parameter prep (weights are tiny; x is untouched) ---
    w0_bf = w0.astype(jnp.bfloat16)
    w1_bf = w1.astype(jnp.bfloat16)
    b0_r = b0.reshape(1, hid).astype(jnp.float32)
    b1_r = b1.reshape(1, c).astype(jnp.float32)

    # --- tile selection ------------------------------------------------------
    # As large as requested, but clamped so the grid keeps >= 2 steps when N
    # allows it (both v7x TensorCores busy); always a multiple of 8 (sublane).
    if n > 128:
        tile = min(batch_tile, _round_up(pl.cdiv(n, 2), 128))
    else:
        tile = min(batch_tile, n)
    tile = _round_up(max(tile, 8), 8)
    grid = (pl.cdiv(n, tile),)

    cost = pl.CostEstimate(
        flops=2 * n * (d * hid + hid * c),
        transcendentals=0,
        bytes_accessed=(x.size * x.dtype.itemsize          # x read, native dtype
                        + w0_bf.size * 2 + b0_r.size * 4    # resident params
                        + w1_bf.size * 2 + b1_r.size * 4
                        + n * c * 4),                       # (N, 2) f32 logits
    )

    out = pl.pallas_call(
        _disc_kernel,
        out_shape=jax.ShapeDtypeStruct((n, c), jnp.float32),
        grid_spec=pltpu.PrefetchScalarGridSpec(
            num_scalar_prefetch=0,
            grid=grid,
            in_specs=[
                pl.BlockSpec((tile, d), lambda i: (i, 0)),    # x tile (streamed)
                pl.BlockSpec((d, hid), lambda i: (0, 0)),     # w0 (resident)
                pl.BlockSpec((1, hid), lambda i: (0, 0)),     # b0
                pl.BlockSpec((hid, c), lambda i: (0, 0)),     # w1
                pl.BlockSpec((1, c), lambda i: (0, 0)),       # b1
            ],
            # Block last dim == full array dim (2), so no 128-divisibility issue;
            # writeback is 8 B/row instead of 512 B/row.
            out_specs=pl.BlockSpec((tile, c), lambda i: (i, 0)),
        ),
        compiler_params=pltpu.CompilerParams(
            dimension_semantics=("parallel",),   # split batch tiles across TCs
            vmem_limit_bytes=64 * 1024 * 1024,   # headroom for tiles >= 2048
        ),
        cost_estimate=cost,
    )(x, w0_bf, b0_r, w1_bf, b1_r)

    return out


def init_params(key, input_size=INPUT_SIZE, hidden=HIDDEN, num_classes=NUM_CLASSES):
    """Deterministic synthetic init mirroring nn.Linear's uniform(-1/sqrt(fan_in), ...)."""
    k0, k1, k2, k3 = jax.random.split(key, 4)
    bound0 = 1.0 / jnp.sqrt(input_size)
    bound1 = 1.0 / jnp.sqrt(hidden)
    # Stored already transposed relative to PyTorch's [out, in] convention.
    w0 = jax.random.uniform(k0, (input_size, hidden), jnp.float32, -bound0, bound0)
    b0 = jax.random.uniform(k1, (1, hidden), jnp.float32, -bound0, bound0)
    w1 = jax.random.uniform(k2, (hidden, num_classes), jnp.float32, -bound1, bound1)
    b1 = jax.random.uniform(k3, (1, num_classes), jnp.float32, -bound1, bound1)
    return w0, b0, w1, b1


if __name__ == "__main__":
    key = jax.random.PRNGKey(0)
    k_x, k_p = jax.random.split(key)

    # Non-multiple of the tile -> exercises the ragged-N masked tail block;
    # tile clamps to 256 so the grid has 2 steps (both v7x TCs).
    batch = 300
    x = jax.random.normal(k_x, (batch, INPUT_SIZE), jnp.float32)
    w0, b0, w1, b1 = init_params(k_p)

    out = discriminator_forward(x, w0, b0, w1, b1)
    out = jax.block_until_ready(out)

    # Pure-JAX f32 reference (grad_reverse is identity in the forward pass).
    ref = jnp.maximum(x @ w0 + b0, 0.0) @ w1 + b1
    assert out.shape == (batch, NUM_CLASSES)
    # bf16 MXU operands with K=512 -> looser tolerance than a pure-f32 path.
    assert jnp.allclose(out, ref, atol=5e-2, rtol=5e-2), float(
        jnp.max(jnp.abs(out - ref)))

    print("KERNEL_OK")
</pallas_src>

<mosaic_0001>
module attributes {stable_mosaic.version = 11 : i64} {
  func.func @_disc_kernel(%arg0: i32, %arg1: memref<256x512xf32, #tpu.memory_space<vmem>>, %arg2: memref<512x256xbf16, #tpu.memory_space<vmem>>, %arg3: memref<1x256xf32, #tpu.memory_space<vmem>>, %arg4: memref<256x2xbf16, #tpu.memory_space<vmem>>, %arg5: memref<1x2xf32, #tpu.memory_space<vmem>>, %arg6: memref<256x2xf32, #tpu.memory_space<vmem>>) attributes {dimension_semantics = [#tpu.dimension_semantics<parallel>], iteration_bounds = array<i64: 2>, scalar_prefetch = 0 : i64, scratch_operands = 0 : i64, tpu.core_type = #tpu.core_type<tc>, window_params = [{transform_indices = @transform_0, window_bounds = array<i64: 256, 512>}, {pipeline_mode = #tpu.pipeline_mode<synchronous>, transform_indices = @transform_1, window_bounds = array<i64: 512, 256>}, {pipeline_mode = #tpu.pipeline_mode<synchronous>, transform_indices = @transform_2, window_bounds = array<i64: 1, 256>}, {pipeline_mode = #tpu.pipeline_mode<synchronous>, transform_indices = @transform_3, window_bounds = array<i64: 256, 2>}, {pipeline_mode = #tpu.pipeline_mode<synchronous>, transform_indices = @transform_4, window_bounds = array<i64: 1, 2>}, {transform_indices = @transform_5, window_bounds = array<i64: 256, 2>}]} {
    %c0 = arith.constant 0 : index
    %c0_0 = arith.constant 0 : index
    %0 = vector.load %arg1[%c0, %c0_0] : memref<256x512xf32, #tpu.memory_space<vmem>>, vector<256x512xf32>
    %1 = arith.truncf %0 : vector<256x512xf32> to vector<256x512xbf16>
    %c0_1 = arith.constant 0 : index
    %c0_2 = arith.constant 0 : index
    %2 = vector.load %arg2[%c0_1, %c0_2] : memref<512x256xbf16, #tpu.memory_space<vmem>>, vector<512x256xbf16>
    %cst = arith.constant dense<0.000000e+00> : vector<256x256xf32>
    %3 = tpu.matmul %1, %2, %cst {dimension_numbers = #tpu.dot_dimension_numbers<[1], [0], [0], [1], [0, 0, 1, 1], [], []>} : vector<256x512xbf16>, vector<512x256xbf16>, vector<256x256xf32> -> vector<256x256xf32>
    %c0_3 = arith.constant 0 : index
    %c0_4 = arith.constant 0 : index
    %4 = vector.load %arg3[%c0_3, %c0_4] : memref<1x256xf32, #tpu.memory_space<vmem>>, vector<1x256xf32>
    %5 = vector.broadcast %4 : vector<1x256xf32> to vector<256x256xf32>
    %6 = arith.addf %3, %5 : vector<256x256xf32>
    %cst_5 = arith.constant 0.000000e+00 : f32
    %7 = vector.broadcast %cst_5 : f32 to vector<256x256xf32>
    %8 = arith.maximumf %6, %7 : vector<256x256xf32>
    %9 = arith.truncf %8 : vector<256x256xf32> to vector<256x256xbf16>
    %c0_6 = arith.constant 0 : index
    %c0_7 = arith.constant 0 : index
    %10 = vector.load %arg4[%c0_6, %c0_7] : memref<256x2xbf16, #tpu.memory_space<vmem>>, vector<256x2xbf16>
    %cst_8 = arith.constant dense<0.000000e+00> : vector<256x2xf32>
    %11 = tpu.matmul %9, %10, %cst_8 {dimension_numbers = #tpu.dot_dimension_numbers<[1], [0], [0], [1], [0, 0, 1, 1], [], []>} : vector<256x256xbf16>, vector<256x2xbf16>, vector<256x2xf32> -> vector<256x2xf32>
    %c0_9 = arith.constant 0 : index
    %c0_10 = arith.constant 0 : index
    %12 = vector.load %arg5[%c0_9, %c0_10] : memref<1x2xf32, #tpu.memory_space<vmem>>, vector<1x2xf32>
    %13 = vector.broadcast %12 : vector<1x2xf32> to vector<256x2xf32>
    %14 = arith.addf %11, %13 : vector<256x2xf32>
    %c0_11 = arith.constant 0 : index
    %c0_12 = arith.constant 0 : index
    %15 = vector.load %arg6[%c0_11, %c0_12] : memref<256x2xf32, #tpu.memory_space<vmem>>, vector<256x2xf32>
    tpu.vector_store %arg6[%c0_11, %c0_12], %14 {strides = array<i32>} : memref<256x2xf32, #tpu.memory_space<vmem>>, vector<256x2xf32>,
    return
  }
  func.func @transform_0(%arg0: i32) -> (i32, i32) {
    %c0_i32 = arith.constant 0 : i32
    %c0_i32_0 = arith.constant 0 : i32
    return %arg0, %c0_i32 : i32, i32
  }
  func.func @transform_1(%arg0: i32) -> (i32, i32) {
    %c0_i32 = arith.constant 0 : i32
    %c0_i32_0 = arith.constant 0 : i32
    %c0_i32_1 = arith.constant 0 : i32
    return %c0_i32, %c0_i32_0 : i32, i32
  }
  func.func @transform_2(%arg0: i32) -> (i32, i32) {
    %c0_i32 = arith.constant 0 : i32
    %c0_i32_0 = arith.constant 0 : i32
    %c0_i32_1 = arith.constant 0 : i32
    return %c0_i32, %c0_i32_0 : i32, i32
  }
  func.func @transform_3(%arg0: i32) -> (i32, i32) {
    %c0_i32 = arith.constant 0 : i32
    %c0_i32_0 = arith.constant 0 : i32
    %c0_i32_1 = arith.constant 0 : i32
    return %c0_i32, %c0_i32_0 : i32, i32
  }
  func.func @transform_4(%arg0: i32) -> (i32, i32) {
    %c0_i32 = arith.constant 0 : i32
    %c0_i32_0 = arith.constant 0 : i32
    %c0_i32_1 = arith.constant 0 : i32
    return %c0_i32, %c0_i32_0 : i32, i32
  }
  func.func @transform_5(%arg0: i32) -> (i32, i32) {
    %c0_i32 = arith.constant 0 : i32
    %c0_i32_0 = arith.constant 0 : i32
    return %arg0, %c0_i32 : i32, i32
  }
}

</mosaic_0001>

<llo_original>
// kernel: tpu_custom_call.1
$region0: #{tpu_custom_call.1}
  #allocation0 [shape = 'u32[]', space=smem, size = 0x4, offset = 0x4, fixed_abs, tag = 'smem constant byte address 0x4 - core index']
  #allocation1 [shape = 'u32[144,128]{1,0:T(1,128)}', space=vmem, size = 0x12000, scoped, tag = 'internal scratch']
  %s0 = inlined_call_operand.hbm [shape: f32[300,512], index: 0, kind: input, shape index: {}]
  %s1 = inlined_call_operand.hbm [shape: bf16[512,256], index: 1, kind: input, shape index: {}]
  %s2 = inlined_call_operand.vmem [shape: f32[1,256], index: 2, kind: input, shape index: {}]
  %s3 = inlined_call_operand.vmem [shape: bf16[256,2], index: 3, kind: input, shape index: {}]
  %s4 = inlined_call_operand.vmem [shape: f32[1,2], index: 4, kind: input, shape index: {}]
  %s5 = inlined_call_operand.vmem [shape: f32[300,2], index: 5, kind: output, shape index: {}]
  %s6 = sld [smem:[#allocation0]]
  $region109: #{tpu_custom_call.1} parent=0
    _
  %s8 = ssub.s32 1, %s6
  %s9 = scalar_select 0, %s8, %s6
  $region1: #{tpu_custom_call.1} parent=0
    #allocation2 [shape = 'u8[1048576]{0}', space=vmem, size = 0x100000, scoped, tag = 'input window, operand 0']
    #allocation3 [shape = 's32[2]{0}', space=sflag, size = 0x8, scoped, tag = 'scoped memory for tpu_custom_call.1']
    #allocation4 [shape = 'u8[262144]{0}', space=vmem, size = 0x40000, scoped, tag = 'input window, operand 1, single buffered']
    #allocation5 [shape = 's32[1]{0}', space=sflag, size = 0x4, scoped, tag = 'scoped memory for tpu_custom_call.1']
    #allocation6 [shape = 'u8[262144]{0}', space=vmem, size = 0x40000, scoped, tag = 'output window, operand 0']
    %10 = vsyncpa [#allocation3], 0
    %s11 = scalar_lea.sflag [#allocation3], 1
    %12 = vsyncpa %s11, 0
    %13 = vsyncpa [#allocation5], 0
    loop: start=0, step=1, limit=4
    $region2: #{tpu_custom_call.1} parent=1 // loop_pre_header
      _
    $region3: #{tpu_custom_call.1} parent=1 // loop_header
      %s15 = sphi 0, %s19
      %p16 = scmp.ge.s32.totalorder %s15, 4
      %s25 = sphi 0, %s27
      %s28 = sphi 0, %s25
      %s29 = sphi 0, %s28
      %s45 = sphi 0, %s29
      %s49 = sphi 0, %s49
      %s51 = sphi 0, %s49
      %s52 = sphi 0, %s51
      %s66 = sphi 0, %s52
      %s70 = sphi 0, %s70
      %s72 = sphi 0, %s70
      %s73 = sphi 0, %s72
      %s87 = sphi 0, %s73
      %s91 = sphi 0, %s91
      %s93 = sphi 0, %s91
      %s94 = sphi 0, %s93
      %s108 = sphi 0, %s94
      %s112 = sphi 0, %s112
      %s114 = sphi 0, %s112
      %s115 = sphi 0, %s114
      %s129 = sphi 0, %s115
      %s135 = sphi 0, %s137
      %s138 = sphi 0, %s135
      %s139 = sphi 0, %s138
      %s155 = sphi 0, %s139
    $region4: #{tpu_custom_call.1} parent=1 // loop_header_branch
      %18 = sbr.rel (%p16) target = $region8
    $region5: #{tpu_custom_call.1} parent=1 // loop_body
      %s20 = ssub.s32 %s15, 1
      %s21 = ssub.s32 %s15, 2
      %s22 = sadd.s32 %s15, 1
      %s23 = ssub.s32 %s15, %s22
      %p24 = scmp.eq.s32.totalorder %s23, 0
      %s26 = sadd.s32 %s25, 1
      %s27 = scalar_select %p24, %s25, %s26
      %p30 = pneg %p24
      %p31 = scmp.eq.s32.totalorder %s15, 1
      %p32 = por %p30, %p31
      %p33 = scmp.ne.s32.totalorder %s25, %s28
      %p34 = scmp.eq.s32.totalorder %s15, 0
      %p35 = por %p33, %p34
      %p36 = scmp.ne.s32.totalorder %s25, %s28
      %p37 = scmp.eq.s32.totalorder %s20, 1
      %p38 = por %p36, %p37
      %p39 = scmp.ne.s32.totalorder %s28, %s29
      %p40 = scmp.eq.s32.totalorder %s20, 0
      %p41 = por %p39, %p40
      %p42 = scmp.ne.s32.totalorder %s28, %s29
      %p43 = scmp.eq.s32.totalorder %s21, 1
      %p44 = por %p42, %p43
      %p46 = scmp.ne.s32.totalorder %s29, %s45
      %p47 = scmp.eq.s32.totalorder %s21, 0
      %p48 = por %p46, %p47
      %s50 = sadd.s32 %s49, 1
      %p53 = scmp.eq.s32.totalorder %s15, 1
      %p54 = scmp.ne.s32.totalorder %s49, %s51
      %p55 = scmp.eq.s32.totalorder %s15, 0
      %p56 = por %p54, %p55
      %p57 = scmp.ne.s32.totalorder %s49, %s51
      %p58 = scmp.eq.s32.totalorder %s20, 1
      %p59 = por %p57, %p58
      %p60 = scmp.ne.s32.totalorder %s51, %s52
      %p61 = scmp.eq.s32.totalorder %s20, 0
      %p62 = por %p60, %p61
      %p63 = scmp.ne.s32.totalorder %s51, %s52
      %p64 = scmp.eq.s32.totalorder %s21, 1
      %p65 = por %p63, %p64
      %p67 = scmp.ne.s32.totalorder %s52, %s66
      %p68 = scmp.eq.s32.totalorder %s21, 0
      %p69 = por %p67, %p68
      %s71 = sadd.s32 %s70, 1
      %p74 = scmp.eq.s32.totalorder %s15, 1
      %p75 = scmp.ne.s32.totalorder %s70, %s72
      %p76 = scmp.eq.s32.totalorder %s15, 0
      %p77 = por %p75, %p76
      %p78 = scmp.ne.s32.totalorder %s70, %s72
      %p79 = scmp.eq.s32.totalorder %s20, 1
      %p80 = por %p78, %p79
      %p81 = scmp.ne.s32.totalorder %s72, %s73
      %p82 = scmp.eq.s32.totalorder %s20, 0
      %p83 = por %p81, %p82
      %p84 = scmp.ne.s32.totalorder %s72, %s73
      %p85 = scmp.eq.s32.totalorder %s21, 1
      %p86 = por %p84, %p85
      %p88 = scmp.ne.s32.totalorder %s73, %s87
      %p89 = scmp.eq.s32.totalorder %s21, 0
      %p90 = por %p88, %p89
      %s92 = sadd.s32 %s91, 1
      %p95 = scmp.eq.s32.totalorder %s15, 1
      %p96 = scmp.ne.s32.totalorder %s91, %s93
      %p97 = scmp.eq.s32.totalorder %s15, 0
      %p98 = por %p96, %p97
      %p99 = scmp.ne.s32.totalorder %s91, %s93
      %p100 = scmp.eq.s32.totalorder %s20, 1
      %p101 = por %p99, %p100
      %p102 = scmp.ne.s32.totalorder %s93, %s94
      %p103 = scmp.eq.s32.totalorder %s20, 0
      %p104 = por %p102, %p103
      %p105 = scmp.ne.s32.totalorder %s93, %s94
      %p106 = scmp.eq.s32.totalorder %s21, 1
      %p107 = por %p105, %p106
      %p109 = scmp.ne.s32.totalorder %s94, %s108
      %p110 = scmp.eq.s32.totalorder %s21, 0
      %p111 = por %p109, %p110
      %s113 = sadd.s32 %s112, 1
      %p116 = scmp.eq.s32.totalorder %s15, 1
      %p117 = scmp.ne.s32.totalorder %s112, %s114
      %p118 = scmp.eq.s32.totalorder %s15, 0
      %p119 = por %p117, %p118
      %p120 = scmp.ne.s32.totalorder %s112, %s114
      %p121 = scmp.eq.s32.totalorder %s20, 1
      %p122 = por %p120, %p121
      %p123 = scmp.ne.s32.totalorder %s114, %s115
      %p124 = scmp.eq.s32.totalorder %s20, 0
      %p125 = por %p123, %p124
      %p126 = scmp.ne.s32.totalorder %s114, %s115
      %p127 = scmp.eq.s32.totalorder %s21, 1
      %p128 = por %p126, %p127
      %p130 = scmp.ne.s32.totalorder %s115, %s129
      %p131 = scmp.eq.s32.totalorder %s21, 0
      %p132 = por %p130, %p131
      %s133 = ssub.s32 %s15, %s22
      %p134 = scmp.eq.s32.totalorder %s133, 0
      %s136 = sadd.s32 %s135, 1
      %s137 = scalar_select %p134, %s135, %s136
      %p140 = pneg %p134
      %p141 = scmp.eq.s32.totalorder %s15, 1
      %p142 = por %p140, %p141
      %p143 = scmp.ne.s32.totalorder %s135, %s138
      %p144 = scmp.eq.s32.totalorder %s15, 0
      %p145 = por %p143, %p144
      %p146 = scmp.ne.s32.totalorder %s135, %s138
      %p147 = scmp.eq.s32.totalorder %s20, 1
      %p148 = por %p146, %p147
      %p149 = scmp.ne.s32.totalorder %s138, %s139
      %p150 = scmp.eq.s32.totalorder %s20, 0
      %p151 = por %p149, %p150
      %p152 = scmp.ne.s32.totalorder %s138, %s139
      %p153 = scmp.eq.s32.totalorder %s21, 1
      %p154 = por %p152, %p153
      %p156 = scmp.ne.s32.totalorder %s139, %s155
      %p157 = scmp.eq.s32.totalorder %s21, 0
      %p158 = por %p156, %p157
      %p159 = scmp.le.s32.totalorder 1, %s15
      %p160 = scmp.lt.s32.totalorder %s15, 3
      %p161 = pnand %p159, %p160
      %p162 = pneg %p161
      // Predicated region
      $region9: #{tpu_custom_call.1} parent=5 // pred_check
        _
      $region10: #{tpu_custom_call.1} parent=5 // pred_check_branch
        %164 = sbr.rel (%p161) target = $region12
      $region11: #{tpu_custom_call.1} parent=5 // pred_region
        %s165 = ssub.s32 %s15, 1
        // Predicated region
        $region13: #{tpu_custom_call.1} parent=11 // pred_check
          %p166 = pneg %p62
        $region14: #{tpu_custom_call.1} parent=11 // pred_check_branch
          %168 = sbr.rel (%p166) target = $region16
        $region15: #{tpu_custom_call.1} parent=11 // pred_region
          %s170 = ssub.s32 8192, 8192
          %171 = vsyncadd [#allocation5], %s170
          %s172 = sshll.u32 [#allocation4], 4
          %s173 = int_to_ptr.vmem [resolvable:$true] %s172
          %178 = dma.hbm_to_vmem [thread:$0]  %s1, 8192, %s173, [#allocation5], 128, 128, 8
        $region16: #{tpu_custom_call.1} parent=11 // pred_fallthru
          _
        // Predicated region
        $region17: #{tpu_custom_call.1} parent=11 // pred_check
          %p179 = pneg %p83
        $region18: #{tpu_custom_call.1} parent=11 // pred_check_branch
          %181 = sbr.rel (%p179) target = $region20
        $region19: #{tpu_custom_call.1} parent=11 // pred_region
          _
        $region20: #{tpu_custom_call.1} parent=11 // pred_fallthru
          _
        // Predicated region
        $region21: #{tpu_custom_call.1} parent=11 // pred_check
          %p182 = pneg %p104
        $region22: #{tpu_custom_call.1} parent=11 // pred_check_branch
          %184 = sbr.rel (%p182) target = $region24
        $region23: #{tpu_custom_call.1} parent=11 // pred_region
          _
        $region24: #{tpu_custom_call.1} parent=11 // pred_fallthru
          _
        // Predicated region
        $region25: #{tpu_custom_call.1} parent=11 // pred_check
          %p185 = pneg %p125
        $region26: #{tpu_custom_call.1} parent=11 // pred_check_branch
          %187 = sbr.rel (%p185) target = $region28
        $region27: #{tpu_custom_call.1} parent=11 // pred_region
          _
        $region28: #{tpu_custom_call.1} parent=11 // pred_fallthru
          _
      $region12: #{tpu_custom_call.1} parent=5 // pred_fallthru
        _
      %p188 = scmp.lt.s32.totalorder %s15, 2
      // Predicated region
      $region29: #{tpu_custom_call.1} parent=5 // pred_check
        %p189 = pneg %p188
      $region30: #{tpu_custom_call.1} parent=5 // pred_check_branch
        %191 = sbr.rel (%p189) target = $region32
      $region31: #{tpu_custom_call.1} parent=5 // pred_region
        // Predicated region
        $region33: #{tpu_custom_call.1} parent=31 // pred_check
          %p192 = pneg %p35
        $region34: #{tpu_custom_call.1} parent=31 // pred_check_branch
          %194 = sbr.rel (%p192) target = $region36
        $region35: #{tpu_custom_call.1} parent=31 // pred_region
          %s195 = sand.u32 %s25, 1
          %s196 = scalar_lea.sflag [#allocation3], %s195
          %s197 = sand.u32 %s25, 1
          %s198 = smul.addr %s197, 1024
          %s199 = scalar_lea.vmem [#allocation2], %s198
          %s200 = smul.u32 32, %s15
          %s201 = ssub.s32 38, %s200
          %p202 = scmp.lt.s32.totalorder %s201, 32
          %s203 = scalar_select %p202, %s201, 32
          %s204 = smul.u32 128, %s203
          %s205 = smul.u32 %s204, 4
          %s207 = ssub.s32 16384, %s205
          %208 = vsyncadd %s196, %s207
          %p209 = scmp.ne.s32.totalorder 0, %s205
          %s210 = smul.addr %s200, 4
          %s211 = smul.addr %s210, 128
          %s212 = scalar_lea.hbm %s0, %s211
          %s213 = smul.u32 32, %s203
          %s214 = sshll.u32 %s199, 4
          %s215 = int_to_ptr.vmem [resolvable:$true] %s214
          %s216 = sshll.u32 %s213, 4
          %220 = dma.hbm_to_vmem [thread:$0]  (%p209), %s212, %s216, %s215, %s196, 512, 512, 32
        $region36: #{tpu_custom_call.1} parent=31 // pred_fallthru
          _
      $region32: #{tpu_custom_call.1} parent=5 // pred_fallthru
        _
      %p221 = scmp.le.s32.totalorder 1, %s15
      %p222 = scmp.lt.s32.totalorder %s15, 3
      %p223 = pnand %p221, %p222
      %p224 = pneg %p223
      // Predicated region
      $region37: #{tpu_custom_call.1} parent=5 // pred_check
        _
      $region38: #{tpu_custom_call.1} parent=5 // pred_check_branch
        %226 = sbr.rel (%p223) target = $region40
      $region39: #{tpu_custom_call.1} parent=5 // pred_region
        %s227 = ssub.s32 %s15, 1
        %s228 = sand.u32 %s28, 1
        %s229 = scalar_lea.sflag [#allocation3], %s228
        %s230 = sand.u32 %s28, 1
        %s231 = smul.addr %s230, 1024
        %s232 = scalar_lea.vmem [#allocation2], %s231
        // Predicated region
        $region41: #{tpu_custom_call.1} parent=39 // pred_check
          %p233 = pneg %p41
        $region42: #{tpu_custom_call.1} parent=39 // pred_check_branch
          %235 = sbr.rel (%p233) target = $region44
        $region43: #{tpu_custom_call.1} parent=39 // pred_region
          %236 = dma.done %s229, 16384
        $region44: #{tpu_custom_call.1} parent=39 // pred_fallthru
          _
        // Predicated region
        $region45: #{tpu_custom_call.1} parent=39 // pred_check
          %p237 = pneg %p62
        $region46: #{tpu_custom_call.1} parent=39 // pred_check_branch
          %239 = sbr.rel (%p237) target = $region48
        $region47: #{tpu_custom_call.1} parent=39 // pred_region
          %240 = dma.done [#allocation5], 8192
        $region48: #{tpu_custom_call.1} parent=39 // pred_fallthru
          _
        %s241 = sand.u32 %s28, 1
        %s242 = scalar_lea.sflag [#allocation3], %s241
        %s243 = sand.u32 %s28, 1
        %s244 = smul.addr %s243, 1024
        %s245 = scalar_lea.vmem [#allocation2], %s244
        %p246 = pneg %p41
        %p247 = pneg %p38
        %p248 = pneg %p62
        %p249 = pneg %p59
        %p250 = pneg %p83
        %p251 = pneg %p80
        %p252 = pneg %p104
        %p253 = pneg %p101
        %p254 = pneg %p125
        %p255 = pneg %p122
        %p256 = pneg %p151
        %p257 = pneg %p148
        %s258 = sand.u32 %s138, 1
        %s259 = sand.u32 %s138, 1
        %s260 = smul.addr %s259, 256
        %s261 = scalar_lea.vmem [#allocation6], %s260
        %s262 = smul.u32 32, %s20
        %s263 = ssub.s32 38, %s262
        %p264 = scmp.lt.s32.totalorder %s263, 32
        %s265 = scalar_select %p264, %s263, 32
        %s266 = smul.u32 128, %s265
        %s267 = smul.u32 %s266, 4
        %s268 = smul.u32 32, %s20
        %s269 = ssub.s32 38, %s268
        %p270 = scmp.lt.s32.totalorder %s269, 32
        %s271 = scalar_select %p270, %s269, 32
        %s272 = smul.u32 128, %s271
        %v274 = vld [vmem:[%s232] sm:$0xff]
        %v275 = vld [vmem:[%s232 + $0x8] sm:$0xff]
        %v276 = vld [vmem:[%s232 + $0x10] sm:$0xff]
        %v277 = vld [vmem:[%s232 + $0x18] sm:$0xff]
        %v278 = vld [vmem:[%s232 + $0x20] sm:$0xff]
        %v279 = vld [vmem:[%s232 + $0x28] sm:$0xff]
        %v280 = vld [vmem:[%s232 + $0x30] sm:$0xff]
        %v281 = vld [vmem:[%s232 + $0x38] sm:$0xff]
        %v282 = vld [vmem:[%s232 + $0x40] sm:$0xff]
        %v283 = vld [vmem:[%s232 + $0x48] sm:$0xff]
        %v284 = vld [vmem:[%s232 + $0x50] sm:$0xff]
        %v285 = vld [vmem:[%s232 + $0x58] sm:$0xff]
        %v286 = vld [vmem:[%s232 + $0x60] sm:$0xff]
        %v287 = vld [vmem:[%s232 + $0x68] sm:$0xff]
        %v288 = vld [vmem:[%s232 + $0x70] sm:$0xff]
        %v289 = vld [vmem:[%s232 + $0x78] sm:$0xff]
        %v290 = vld [vmem:[%s232 + $0x80] sm:$0xff]
        %v291 = vld [vmem:[%s232 + $0x88] sm:$0xff]
        %v292 = vld [vmem:[%s232 + $0x90] sm:$0xff]
        %v293 = vld [vmem:[%s232 + $0x98] sm:$0xff]
        %v294 = vld [vmem:[%s232 + $0xa0] sm:$0xff]
        %v295 = vld [vmem:[%s232 + $0xa8] sm:$0xff]
        %v296 = vld [vmem:[%s232 + $0xb0] sm:$0xff]
        %v297 = vld [vmem:[%s232 + $0xb8] sm:$0xff]
        %v298 = vld [vmem:[%s232 + $0xc0] sm:$0xff]
        %v299 = vld [vmem:[%s232 + $0xc8] sm:$0xff]
        %v300 = vld [vmem:[%s232 + $0xd0] sm:$0xff]
        %v301 = vld [vmem:[%s232 + $0xd8] sm:$0xff]
        %v302 = vld [vmem:[%s232 + $0xe0] sm:$0xff]
        %v303 = vld [vmem:[%s232 + $0xe8] sm:$0xff]
        %v304 = vld [vmem:[%s232 + $0xf0] sm:$0xff]
        %v305 = vld [vmem:[%s232 + $0xf8] sm:$0xff]
        %v306 = vld [vmem:[%s232 + $0x100] sm:$0xff]
        %v307 = vld [vmem:[%s232 + $0x108] sm:$0xff]
        %v308 = vld [vmem:[%s232 + $0x110] sm:$0xff]
        %v309 = vld [vmem:[%s232 + $0x118] sm:$0xff]
        %v310 = vld [vmem:[%s232 + $0x120] sm:$0xff]
        %v311 = vld [vmem:[%s232 + $0x128] sm:$0xff]
        %v312 = vld [vmem:[%s232 + $0x130] sm:$0xff]
        %v313 = vld [vmem:[%s232 + $0x138] sm:$0xff]
        %v314 = vld [vmem:[%s232 + $0x140] sm:$0xff]
        %v315 = vld [vmem:[%s232 + $0x148] sm:$0xff]
        %v316 = vld [vmem:[%s232 + $0x150] sm:$0xff]
        %v317 = vld [vmem:[%s232 + $0x158] sm:$0xff]
        %v318 = vld [vmem:[%s232 + $0x160] sm:$0xff]
        %v319 = vld [vmem:[%s232 + $0x168] sm:$0xff]
        %v320 = vld [vmem:[%s232 + $0x170] sm:$0xff]
        %v321 = vld [vmem:[%s232 + $0x178] sm:$0xff]
        %v322 = vld [vmem:[%s232 + $0x180] sm:$0xff]
        %v323 = vld [vmem:[%s232 + $0x188] sm:$0xff]
        %v324 = vld [vmem:[%s232 + $0x190] sm:$0xff]
        %v325 = vld [vmem:[%s232 + $0x198] sm:$0xff]
        %v326 = vld [vmem:[%s232 + $0x1a0] sm:$0xff]
        %v327 = vld [vmem:[%s232 + $0x1a8] sm:$0xff]
        %v328 = vld [vmem:[%s232 + $0x1b0] sm:$0xff]
        %v329 = vld [vmem:[%s232 + $0x1b8] sm:$0xff]
        %v330 = vld [vmem:[%s232 + $0x1c0] sm:$0xff]
        %v331 = vld [vmem:[%s232 + $0x1c8] sm:$0xff]
        %v332 = vld [vmem:[%s232 + $0x1d0] sm:$0xff]
        %v333 = vld [vmem:[%s232 + $0x1d8] sm:$0xff]
        %v334 = vld [vmem:[%s232 + $0x1e0] sm:$0xff]
        %v335 = vld [vmem:[%s232 + $0x1e8] sm:$0xff]
        %v336 = vld [vmem:[%s232 + $0x1f0] sm:$0xff]
        %v337 = vld [vmem:[%s232 + $0x1f8] sm:$0xff]
        %v338 = vld [vmem:[%s232 + $0x200] sm:$0xff]
        %v339 = vld [vmem:[%s232 + $0x208] sm:$0xff]
        %v340 = vld [vmem:[%s232 + $0x210] sm:$0xff]
        %v341 = vld [vmem:[%s232 + $0x218] sm:$0xff]
        %v342 = vld [vmem:[%s232 + $0x220] sm:$0xff]
        %v343 = vld [vmem:[%s232 + $0x228] sm:$0xff]
        %v344 = vld [vmem:[%s232 + $0x230] sm:$0xff]
        %v345 = vld [vmem:[%s232 + $0x238] sm:$0xff]
        %v346 = vld [vmem:[%s232 + $0x240] sm:$0xff]
        %v347 = vld [vmem:[%s232 + $0x248] sm:$0xff]
        %v348 = vld [vmem:[%s232 + $0x250] sm:$0xff]
        %v349 = vld [vmem:[%s232 + $0x258] sm:$0xff]
        %v350 = vld [vmem:[%s232 + $0x260] sm:$0xff]
        %v351 = vld [vmem:[%s232 + $0x268] sm:$0xff]
        %v352 = vld [vmem:[%s232 + $0x270] sm:$0xff]
        %v353 = vld [vmem:[%s232 + $0x278] sm:$0xff]
        %v354 = vld [vmem:[%s232 + $0x280] sm:$0xff]
        %v355 = vld [vmem:[%s232 + $0x288] sm:$0xff]
        %v356 = vld [vmem:[%s232 + $0x290] sm:$0xff]
        %v357 = vld [vmem:[%s232 + $0x298] sm:$0xff]
        %v358 = vld [vmem:[%s232 + $0x2a0] sm:$0xff]
        %v359 = vld [vmem:[%s232 + $0x2a8] sm:$0xff]
        %v360 = vld [vmem:[%s232 + $0x2b0] sm:$0xff]
        %v361 = vld [vmem:[%s232 + $0x2b8] sm:$0xff]
        %v362 = vld [vmem:[%s232 + $0x2c0] sm:$0xff]
        %v363 = vld [vmem:[%s232 + $0x2c8] sm:$0xff]
        %v364 = vld [vmem:[%s232 + $0x2d0] sm:$0xff]
        %v365 = vld [vmem:[%s232 + $0x2d8] sm:$0xff]
        %v366 = vld [vmem:[%s232 + $0x2e0] sm:$0xff]
        %v367 = vld [vmem:[%s232 + $0x2e8] sm:$0xff]
        %v368 = vld [vmem:[%s232 + $0x2f0] sm:$0xff]
        %v369 = vld [vmem:[%s232 + $0x2f8] sm:$0xff]
        %v370 = vld [vmem:[%s232 + $0x300] sm:$0xff]
        %v371 = vld [vmem:[%s232 + $0x308] sm:$0xff]
        %v372 = vld [vmem:[%s232 + $0x310] sm:$0xff]
        %v373 = vld [vmem:[%s232 + $0x318] sm:$0xff]
        %v374 = vld [vmem:[%s232 + $0x320] sm:$0xff]
        %v375 = vld [vmem:[%s232 + $0x328] sm:$0xff]
        %v376 = vld [vmem:[%s232 + $0x330] sm:$0xff]
        %v377 = vld [vmem:[%s232 + $0x338] sm:$0xff]
        %v378 = vld [vmem:[%s232 + $0x340] sm:$0xff]
        %v379 = vld [vmem:[%s232 + $0x348] sm:$0xff]
        %v380 = vld [vmem:[%s232 + $0x350] sm:$0xff]
        %v381 = vld [vmem:[%s232 + $0x358] sm:$0xff]
        %v382 = vld [vmem:[%s232 + $0x360] sm:$0xff]
        %v383 = vld [vmem:[%s232 + $0x368] sm:$0xff]
        %v384 = vld [vmem:[%s232 + $0x370] sm:$0xff]
        %v385 = vld [vmem:[%s232 + $0x378] sm:$0xff]
        %v386 = vld [vmem:[%s232 + $0x380] sm:$0xff]
        %v387 = vld [vmem:[%s232 + $0x388] sm:$0xff]
        %v388 = vld [vmem:[%s232 + $0x390] sm:$0xff]
        %v389 = vld [vmem:[%s232 + $0x398] sm:$0xff]
        %v390 = vld [vmem:[%s232 + $0x3a0] sm:$0xff]
        %v391 = vld [vmem:[%s232 + $0x3a8] sm:$0xff]
        %v392 = vld [vmem:[%s232 + $0x3b0] sm:$0xff]
        %v393 = vld [vmem:[%s232 + $0x3b8] sm:$0xff]
        %v394 = vld [vmem:[%s232 + $0x3c0] sm:$0xff]
        %v395 = vld [vmem:[%s232 + $0x3c8] sm:$0xff]
        %v396 = vld [vmem:[%s232 + $0x3d0] sm:$0xff]
        %v397 = vld [vmem:[%s232 + $0x3d8] sm:$0xff]
        %v398 = vld [vmem:[%s232 + $0x3e0] sm:$0xff]
        %v399 = vld [vmem:[%s232 + $0x3e8] sm:$0xff]
        %v400 = vld [vmem:[%s232 + $0x3f0] sm:$0xff]
        %v401 = vld [vmem:[%s232 + $0x3f8] sm:$0xff]
        %v402 = vpack.c.bf16 %v278, %v274
        %v403 = vpack.c.bf16 %v279, %v275
        %v404 = vpack.c.bf16 %v280, %v276
        %v405 = vpack.c.bf16 %v281, %v277
        %v406 = vpack.c.bf16 %v286, %v282
        %v407 = vpack.c.bf16 %v287, %v283
        %v408 = vpack.c.bf16 %v288, %v284
        %v409 = vpack.c.bf16 %v289, %v285
        %v410 = vpack.c.bf16 %v294, %v290
        %v411 = vpack.c.bf16 %v295, %v291
        %v412 = vpack.c.bf16 %v296, %v292
        %v413 = vpack.c.bf16 %v297, %v293
        %v414 = vpack.c.bf16 %v302, %v298
        %v415 = vpack.c.bf16 %v303, %v299
        %v416 = vpack.c.bf16 %v304, %v300
        %v417 = vpack.c.bf16 %v305, %v301
        %v418 = vpack.c.bf16 %v310, %v306
        %v419 = vpack.c.bf16 %v311, %v307
        %v420 = vpack.c.bf16 %v312, %v308
        %v421 = vpack.c.bf16 %v313, %v309
        %v422 = vpack.c.bf16 %v318, %v314
        %v423 = vpack.c.bf16 %v319, %v315
        %v424 = vpack.c.bf16 %v320, %v316
        %v425 = vpack.c.bf16 %v321, %v317
        %v426 = vpack.c.bf16 %v326, %v322
        %v427 = vpack.c.bf16 %v327, %v323
        %v428 = vpack.c.bf16 %v328, %v324
        %v429 = vpack.c.bf16 %v329, %v325
        %v430 = vpack.c.bf16 %v334, %v330
        %v431 = vpack.c.bf16 %v335, %v331
        %v432 = vpack.c.bf16 %v336, %v332
        %v433 = vpack.c.bf16 %v337, %v333
        %v434 = vpack.c.bf16 %v342, %v338
        %v435 = vpack.c.bf16 %v343, %v339
        %v436 = vpack.c.bf16 %v344, %v340
        %v437 = vpack.c.bf16 %v345, %v341
        %v438 = vpack.c.bf16 %v350, %v346
        %v439 = vpack.c.bf16 %v351, %v347
        %v440 = vpack.c.bf16 %v352, %v348
        %v441 = vpack.c.bf16 %v353, %v349
        %v442 = vpack.c.bf16 %v358, %v354
        %v443 = vpack.c.bf16 %v359, %v355
        %v444 = vpack.c.bf16 %v360, %v356
        %v445 = vpack.c.bf16 %v361, %v357
        %v446 = vpack.c.bf16 %v366, %v362
        %v447 = vpack.c.bf16 %v367, %v363
        %v448 = vpack.c.bf16 %v368, %v364
        %v449 = vpack.c.bf16 %v369, %v365
        %v450 = vpack.c.bf16 %v374, %v370
        %v451 = vpack.c.bf16 %v375, %v371
        %v452 = vpack.c.bf16 %v376, %v372
        %v453 = vpack.c.bf16 %v377, %v373
        %v454 = vpack.c.bf16 %v382, %v378
        %v455 = vpack.c.bf16 %v383, %v379
        %v456 = vpack.c.bf16 %v384, %v380
        %v457 = vpack.c.bf16 %v385, %v381
        %v458 = vpack.c.bf16 %v390, %v386
        %v459 = vpack.c.bf16 %v391, %v387
        %v460 = vpack.c.bf16 %v392, %v388
        %v461 = vpack.c.bf16 %v393, %v389
        %v462 = vpack.c.bf16 %v398, %v394
        %v463 = vpack.c.bf16 %v399, %v395
        %v464 = vpack.c.bf16 %v400, %v396
        %v465 = vpack.c.bf16 %v401, %v397
        %v466 = vld [vmem:[#allocation4] sm:$0xff]
        %v467 = vld [vmem:[#allocation4 + $0x8] sm:$0xff]
        %v468 = vld [vmem:[#allocation4 + $0x10] sm:$0xff]
        %v469 = vld [vmem:[#allocation4 + $0x18] sm:$0xff]
        %v470 = vld [vmem:[#allocation4 + $0x20] sm:$0xff]
        %v471 = vld [vmem:[#allocation4 + $0x28] sm:$0xff]
        %v472 = vld [vmem:[#allocation4 + $0x30] sm:$0xff]
        %v473 = vld [vmem:[#allocation4 + $0x38] sm:$0xff]
        %v474 = vld [vmem:[#allocation4 + $0x40] sm:$0xff]
        %v475 = vld [vmem:[#allocation4 + $0x48] sm:$0xff]
        %v476 = vld [vmem:[#allocation4 + $0x50] sm:$0xff]
        %v477 = vld [vmem:[#allocation4 + $0x58] sm:$0xff]
        %v478 = vld [vmem:[#allocation4 + $0x60] sm:$0xff]
        %v479 = vld [vmem:[#allocation4 + $0x68] sm:$0xff]
        %v480 = vld [vmem:[#allocation4 + $0x70] sm:$0xff]
        %v481 = vld [vmem:[#allocation4 + $0x78] sm:$0xff]
        %v482 = vld [vmem:[#allocation4 + $0x80] sm:$0xff]
        %v483 = vld [vmem:[#allocation4 + $0x88] sm:$0xff]
        %v484 = vld [vmem:[#allocation4 + $0x90] sm:$0xff]
        %v485 = vld [vmem:[#allocation4 + $0x98] sm:$0xff]
        %v486 = vld [vmem:[#allocation4 + $0xa0] sm:$0xff]
        %v487 = vld [vmem:[#allocation4 + $0xa8] sm:$0xff]
        %v488 = vld [vmem:[#allocation4 + $0xb0] sm:$0xff]
        %v489 = vld [vmem:[#allocation4 + $0xb8] sm:$0xff]
        %v490 = vld [vmem:[#allocation4 + $0xc0] sm:$0xff]
        %v491 = vld [vmem:[#allocation4 + $0xc8] sm:$0xff]
        %v492 = vld [vmem:[#allocation4 + $0xd0] sm:$0xff]
        %v493 = vld [vmem:[#allocation4 + $0xd8] sm:$0xff]
        %v494 = vld [vmem:[#allocation4 + $0xe0] sm:$0xff]
        %v495 = vld [vmem:[#allocation4 + $0xe8] sm:$0xff]
        %v496 = vld [vmem:[#allocation4 + $0xf0] sm:$0xff]
        %v497 = vld [vmem:[#allocation4 + $0xf8] sm:$0xff]
        %v498 = vld [vmem:[#allocation4 + $0x100] sm:$0xff]
        %v499 = vld [vmem:[#allocation4 + $0x108] sm:$0xff]
        %v500 = vld [vmem:[#allocation4 + $0x110] sm:$0xff]
        %v501 = vld [vmem:[#allocation4 + $0x118] sm:$0xff]
        %v502 = vld [vmem:[#allocation4 + $0x120] sm:$0xff]
        %v503 = vld [vmem:[#allocation4 + $0x128] sm:$0xff]
        %v504 = vld [vmem:[#allocation4 + $0x130] sm:$0xff]
        %v505 = vld [vmem:[#allocation4 + $0x138] sm:$0xff]
        %v506 = vld [vmem:[#allocation4 + $0x140] sm:$0xff]
        %v507 = vld [vmem:[#allocation4 + $0x148] sm:$0xff]
        %v508 = vld [vmem:[#allocation4 + $0x150] sm:$0xff]
        %v509 = vld [vmem:[#allocation4 + $0x158] sm:$0xff]
        %v510 = vld [vmem:[#allocation4 + $0x160] sm:$0xff]
        %v511 = vld [vmem:[#allocation4 + $0x168] sm:$0xff]
        %v512 = vld [vmem:[#allocation4 + $0x170] sm:$0xff]
        %v513 = vld [vmem:[#allocation4 + $0x178] sm:$0xff]
        %v514 = vld [vmem:[#allocation4 + $0x180] sm:$0xff]
        %v515 = vld [vmem:[#allocation4 + $0x188] sm:$0xff]
        %v516 = vld [vmem:[#allocation4 + $0x190] sm:$0xff]
        %v517 = vld [vmem:[#allocation4 + $0x198] sm:$0xff]
        %v518 = vld [vmem:[#allocation4 + $0x1a0] sm:$0xff]
        %v519 = vld [vmem:[#allocation4 + $0x1a8] sm:$0xff]
        %v520 = vld [vmem:[#allocation4 + $0x1b0] sm:$0xff]
        %v521 = vld [vmem:[#allocation4 + $0x1b8] sm:$0xff]
        %v522 = vld [vmem:[#allocation4 + $0x1c0] sm:$0xff]
        %v523 = vld [vmem:[#allocation4 + $0x1c8] sm:$0xff]
        %v524 = vld [vmem:[#allocation4 + $0x1d0] sm:$0xff]
        %v525 = vld [vmem:[#allocation4 + $0x1d8] sm:$0xff]
        %v526 = vld [vmem:[#allocation4 + $0x1e0] sm:$0xff]
        %v527 = vld [vmem:[#allocation4 + $0x1e8] sm:$0xff]
        %v528 = vld [vmem:[#allocation4 + $0x1f0] sm:$0xff]
        %v529 = vld [vmem:[#allocation4 + $0x1f8] sm:$0xff]
        %v530 = vld [vmem:[%s2] sm:$0x3]
        %v532 = vlaneseq
        %v533 = vshrl.u32 %v532, 7
        %v534 = vsub.s32 0, %v533
        %v535 = vrot.slane %v530, %v534
        %v536 = vlaneseq
        %v537 = vshrl.u32 %v536, 7
        %v538 = vsub.s32 1, %v537
        %v539 = vrot.slane %v530, %v538
        %v606 = vunpack.c.l.b16 %v466
        %v607 = vunpack.c.h.b16 %v466
        %v608 = vunpack.c.l.b16 %v467
        %v609 = vunpack.c.h.b16 %v467
        %v610 = vunpack.c.l.b16 %v468
        %v611 = vunpack.c.h.b16 %v468
        %v612 = vunpack.c.l.b16 %v469
        %v613 = vunpack.c.h.b16 %v469
        %v614 = vunpack.c.l.b16 %v470
        %v615 = vunpack.c.h.b16 %v470
        %v616 = vunpack.c.l.b16 %v471
        %v617 = vunpack.c.h.b16 %v471
        %v618 = vunpack.c.l.b16 %v472
        %v619 = vunpack.c.h.b16 %v472
        %v620 = vunpack.c.l.b16 %v473
        %v621 = vunpack.c.h.b16 %v473
        %v622 = vunpack.c.l.b16 %v474
        %v623 = vunpack.c.h.b16 %v474
        %v624 = vunpack.c.l.b16 %v475
        %v625 = vunpack.c.h.b16 %v475
        %v626 = vunpack.c.l.b16 %v476
        %v627 = vunpack.c.h.b16 %v476
        %v628 = vunpack.c.l.b16 %v477
        %v629 = vunpack.c.h.b16 %v477
        %v630 = vunpack.c.l.b16 %v478
        %v631 = vunpack.c.h.b16 %v478
        %v632 = vunpack.c.l.b16 %v479
        %v633 = vunpack.c.h.b16 %v479
        %v634 = vunpack.c.l.b16 %v480
        %v635 = vunpack.c.h.b16 %v480
        %v636 = vunpack.c.l.b16 %v481
        %v637 = vunpack.c.h.b16 %v481
        %v638 = vunpack.c.l.b16 %v482
        %v639 = vunpack.c.h.b16 %v482
        %v640 = vunpack.c.l.b16 %v483
        %v641 = vunpack.c.h.b16 %v483
        %v642 = vunpack.c.l.b16 %v484
        %v643 = vunpack.c.h.b16 %v484
        %v644 = vunpack.c.l.b16 %v485
        %v645 = vunpack.c.h.b16 %v485
        %v646 = vunpack.c.l.b16 %v486
        %v647 = vunpack.c.h.b16 %v486
        %v648 = vunpack.c.l.b16 %v487
        %v649 = vunpack.c.h.b16 %v487
        %v650 = vunpack.c.l.b16 %v488
        %v651 = vunpack.c.h.b16 %v488
        %v652 = vunpack.c.l.b16 %v489
        %v653 = vunpack.c.h.b16 %v489
        %v654 = vunpack.c.l.b16 %v490
        %v655 = vunpack.c.h.b16 %v490
        %v656 = vunpack.c.l.b16 %v491
        %v657 = vunpack.c.h.b16 %v491
        %v658 = vunpack.c.l.b16 %v492
        %v659 = vunpack.c.h.b16 %v492
        %v660 = vunpack.c.l.b16 %v493
        %v661 = vunpack.c.h.b16 %v493
        %v662 = vunpack.c.l.b16 %v494
        %v663 = vunpack.c.h.b16 %v494
        %v664 = vunpack.c.l.b16 %v495
        %v665 = vunpack.c.h.b16 %v495
        %v666 = vunpack.c.l.b16 %v496
        %v667 = vunpack.c.h.b16 %v496
        %v668 = vunpack.c.l.b16 %v497
        %v669 = vunpack.c.h.b16 %v497
        %v670 = vunpack.c.l.b16 %v498
        %v671 = vunpack.c.h.b16 %v498
        %v672 = vunpack.c.l.b16 %v499
        %v673 = vunpack.c.h.b16 %v499
        %v674 = vunpack.c.l.b16 %v500
        %v675 = vunpack.c.h.b16 %v500
        %v676 = vunpack.c.l.b16 %v501
        %v677 = vunpack.c.h.b16 %v501
        %v678 = vunpack.c.l.b16 %v502
        %v679 = vunpack.c.h.b16 %v502
        %v680 = vunpack.c.l.b16 %v503
        %v681 = vunpack.c.h.b16 %v503
        %v682 = vunpack.c.l.b16 %v504
        %v683 = vunpack.c.h.b16 %v504
        %v684 = vunpack.c.l.b16 %v505
        %v685 = vunpack.c.h.b16 %v505
        %v686 = vunpack.c.l.b16 %v506
        %v687 = vunpack.c.h.b16 %v506
        %v688 = vunpack.c.l.b16 %v507
        %v689 = vunpack.c.h.b16 %v507
        %v690 = vunpack.c.l.b16 %v508
        %v691 = vunpack.c.h.b16 %v508
        %v692 = vunpack.c.l.b16 %v509
        %v693 = vunpack.c.h.b16 %v509
        %v694 = vunpack.c.l.b16 %v510
        %v695 = vunpack.c.h.b16 %v510
        %v696 = vunpack.c.l.b16 %v511
        %v697 = vunpack.c.h.b16 %v511
        %v698 = vunpack.c.l.b16 %v512
        %v699 = vunpack.c.h.b16 %v512
        %v700 = vunpack.c.l.b16 %v513
        %v701 = vunpack.c.h.b16 %v513
        %v702 = vunpack.c.l.b16 %v514
        %v703 = vunpack.c.h.b16 %v514
        %v704 = vunpack.c.l.b16 %v515
        %v705 = vunpack.c.h.b16 %v515
        %v706 = vunpack.c.l.b16 %v516
        %v707 = vunpack.c.h.b16 %v516
        %v708 = vunpack.c.l.b16 %v517
        %v709 = vunpack.c.h.b16 %v517
        %v710 = vunpack.c.l.b16 %v518
        %v711 = vunpack.c.h.b16 %v518
        %v712 = vunpack.c.l.b16 %v519
        %v713 = vunpack.c.h.b16 %v519
        %v714 = vunpack.c.l.b16 %v520
        %v715 = vunpack.c.h.b16 %v520
        %v716 = vunpack.c.l.b16 %v521
        %v717 = vunpack.c.h.b16 %v521
        %v718 = vunpack.c.l.b16 %v522
        %v719 = vunpack.c.h.b16 %v522
        %v720 = vunpack.c.l.b16 %v523
        %v721 = vunpack.c.h.b16 %v523
        %v722 = vunpack.c.l.b16 %v524
        %v723 = vunpack.c.h.b16 %v524
        %v724 = vunpack.c.l.b16 %v525
        %v725 = vunpack.c.h.b16 %v525
        %v726 = vunpack.c.l.b16 %v526
        %v727 = vunpack.c.h.b16 %v526
        %v728 = vunpack.c.l.b16 %v527
        %v729 = vunpack.c.h.b16 %v527
        %v730 = vunpack.c.l.b16 %v528
        %v731 = vunpack.c.h.b16 %v528
        %v732 = vunpack.c.l.b16 %v529
        %v733 = vunpack.c.h.b16 %v529
        %v734 = vpack.c.b16 %v608, %v606
        %v735 = vpack.c.b16 %v609, %v607
        %v736 = vpack.c.b16 %v612, %v610
        %v737 = vpack.c.b16 %v613, %v611
        %v738 = vpack.c.b16 %v616, %v614
        %v739 = vpack.c.b16 %v617, %v615
        %v740 = vpack.c.b16 %v620, %v618
        %v741 = vpack.c.b16 %v621, %v619
        %v742 = vpack.c.b16 %v624, %v622
        %v743 = vpack.c.b16 %v625, %v623
        %v744 = vpack.c.b16 %v628, %v626
        %v745 = vpack.c.b16 %v629, %v627
        %v746 = vpack.c.b16 %v632, %v630
        %v747 = vpack.c.b16 %v633, %v631
        %v748 = vpack.c.b16 %v636, %v634
        %v749 = vpack.c.b16 %v637, %v635
        %v750 = vpack.c.b16 %v640, %v638
        %v751 = vpack.c.b16 %v641, %v639
        %v752 = vpack.c.b16 %v644, %v642
        %v753 = vpack.c.b16 %v645, %v643
        %v754 = vpack.c.b16 %v648, %v646
        %v755 = vpack.c.b16 %v649, %v647
        %v756 = vpack.c.b16 %v652, %v650
        %v757 = vpack.c.b16 %v653, %v651
        %v758 = vpack.c.b16 %v656, %v654
        %v759 = vpack.c.b16 %v657, %v655
        %v760 = vpack.c.b16 %v660, %v658
        %v761 = vpack.c.b16 %v661, %v659
        %v762 = vpack.c.b16 %v664, %v662
        %v763 = vpack.c.b16 %v665, %v663
        %v764 = vpack.c.b16 %v668, %v666
        %v765 = vpack.c.b16 %v669, %v667
        %v766 = vpack.c.b16 %v672, %v670
        %v767 = vpack.c.b16 %v673, %v671
        %v768 = vpack.c.b16 %v676, %v674
        %v769 = vpack.c.b16 %v677, %v675
        %v770 = vpack.c.b16 %v680, %v678
        %v771 = vpack.c.b16 %v681, %v679
        %v772 = vpack.c.b16 %v684, %v682
        %v773 = vpack.c.b16 %v685, %v683
        %v774 = vpack.c.b16 %v688, %v686
        %v775 = vpack.c.b16 %v689, %v687
        %v776 = vpack.c.b16 %v692, %v690
        %v777 = vpack.c.b16 %v693, %v691
        %v778 = vpack.c.b16 %v696, %v694
        %v779 = vpack.c.b16 %v697, %v695
        %v780 = vpack.c.b16 %v700, %v698
        %v781 = vpack.c.b16 %v701, %v699
        %v782 = vpack.c.b16 %v704, %v702
        %v783 = vpack.c.b16 %v705, %v703
        %v784 = vpack.c.b16 %v708, %v706
        %v785 = vpack.c.b16 %v709, %v707
        %v786 = vpack.c.b16 %v712, %v710
        %v787 = vpack.c.b16 %v713, %v711
        %v788 = vpack.c.b16 %v716, %v714
        %v789 = vpack.c.b16 %v717, %v715
        %v790 = vpack.c.b16 %v720, %v718
        %v791 = vpack.c.b16 %v721, %v719
        %v792 = vpack.c.b16 %v724, %v722
        %v793 = vpack.c.b16 %v725, %v723
        %v794 = vpack.c.b16 %v728, %v726
        %v795 = vpack.c.b16 %v729, %v727
        %v796 = vpack.c.b16 %v732, %v730
        %v797 = vpack.c.b16 %v733, %v731
        %862 = vmatprep.subr.bf16.mxu0 %v749
        %863 = vmatpush1.bf16.msra.mxu0 %v748
        %864 = vmatprep.subr.bf16.mxu0 %v747
        %865 = vmatpush1.bf16.msra.mxu0 %v746
        %866 = vmatprep.subr.bf16.mxu0 %v745
        %867 = vmatpush1.bf16.msra.mxu0 %v744
        %868 = vmatprep.subr.bf16.mxu0 %v743
        %869 = vmatpush1.bf16.msra.mxu0 %v742
        %870 = vmatprep.subr.bf16.mxu0 %v741
        %871 = vmatpush1.bf16.msra.mxu0 %v740
        %872 = vmatprep.subr.bf16.mxu0 %v739
        %873 = vmatpush1.bf16.msra.mxu0 %v738
        %874 = vmatprep.subr.bf16.mxu0 %v737
        %875 = vmatpush1.bf16.msra.mxu0 %v736
        %876 = vmatprep.subr.bf16.mxu0 %v735
        %877 = vmatpush1.bf16.msra.mxu0 %v734
        %878 = vmatprep.subr.bf16.mxu0 %v765
        %879 = vmatpush2.bf16.msra.mxu0 %v764
        %880 = vmatprep.subr.bf16.mxu0 %v763
        %881 = vmatpush2.bf16.msra.mxu0 %v762
        %882 = vmatprep.subr.bf16.mxu0 %v761
        %883 = vmatpush2.bf16.msra.mxu0 %v760
        %884 = vmatprep.subr.bf16.mxu0 %v759
        %885 = vmatpush2.bf16.msra.mxu0 %v758
        %886 = vmatprep.subr.bf16.mxu0 %v757
        %887 = vmatpush2.bf16.msra.mxu0 %v756
        %888 = vmatprep.subr.bf16.mxu0 %v755
        %889 = vmatpush2.bf16.msra.mxu0 %v754
        %890 = vmatprep.subr.bf16.mxu0 %v753
        %891 = vmatpush2.bf16.msra.mxu0 %v752
        %892 = vmatprep.subr.bf16.mxu0 %v751
        %893 = vmatpush2.bf16.msra.mxu0 %v750
        %894 = vmatprep.mubr.bf16.mxu0 %v403
        %895 = vmatmul.mubr.bf16.gmra.mxu0 %v402
        %v896 = vpop.f32.mrf.mxu0
        %v897 = vadd.f32 %v535, %v896
        %v898 = vpop.f32.mrf.mxu0
        %v899 = vadd.f32 %v539, %v898
        %v900 = vpop.f32.mrf.mxu0
        %v901 = vadd.f32 %v535, %v900
        %v902 = vpop.f32.mrf.mxu0
        %v903 = vadd.f32 %v539, %v902
        %904 = vmatprep.mubr.bf16.mxu0 %v407
        %905 = vmatmul.mubr.bf16.gmra.mxu0 %v406
        %v906 = vpop.f32.mrf.mxu0
        %v907 = vadd.f32 %v535, %v906
        %v908 = vpop.f32.mrf.mxu0
        %v909 = vadd.f32 %v539, %v908
        %v910 = vpop.f32.mrf.mxu0
        %v911 = vadd.f32 %v535, %v910
        %v912 = vpop.f32.mrf.mxu0
        %v913 = vadd.f32 %v539, %v912
        %914 = vmatprep.mubr.bf16.mxu0 %v411
        %915 = vmatmul.mubr.bf16.gmra.mxu0 %v410
        %v916 = vpop.f32.mrf.mxu0
        %v917 = vadd.f32 %v535, %v916
        %v918 = vpop.f32.mrf.mxu0
        %v919 = vadd.f32 %v539, %v918
        %v920 = vpop.f32.mrf.mxu0
        %v921 = vadd.f32 %v535, %v920
        %v922 = vpop.f32.mrf.mxu0
        %v923 = vadd.f32 %v539, %v922
        %924 = vmatprep.mubr.bf16.mxu0 %v415
        %925 = vmatmul.mubr.bf16.gmra.mxu0 %v414
        %v926 = vpop.f32.mrf.mxu0
        %v927 = vadd.f32 %v535, %v926
        %v928 = vpop.f32.mrf.mxu0
        %v929 = vadd.f32 %v539, %v928
        %v930 = vpop.f32.mrf.mxu0
        %v931 = vadd.f32 %v535, %v930
        %v932 = vpop.f32.mrf.mxu0
        %v933 = vadd.f32 %v539, %v932
        %934 = vmatprep.mubr.bf16.mxu0 %v419
        %935 = vmatmul.mubr.bf16.gmra.mxu0 %v418
        %v936 = vpop.f32.mrf.mxu0
        %v937 = vadd.f32 %v535, %v936
        %v938 = vpop.f32.mrf.mxu0
        %v939 = vadd.f32 %v539, %v938
        %v940 = vpop.f32.mrf.mxu0
        %v941 = vadd.f32 %v535, %v940
        %v942 = vpop.f32.mrf.mxu0
        %v943 = vadd.f32 %v539, %v942
        %944 = vmatprep.mubr.bf16.mxu0 %v423
        %945 = vmatmul.mubr.bf16.gmra.mxu0 %v422
        %v946 = vpop.f32.mrf.mxu0
        %v947 = vadd.f32 %v535, %v946
        %v948 = vpop.f32.mrf.mxu0
        %v949 = vadd.f32 %v539, %v948
        %v950 = vpop.f32.mrf.mxu0
        %v951 = vadd.f32 %v535, %v950
        %v952 = vpop.f32.mrf.mxu0
        %v953 = vadd.f32 %v539, %v952
        %954 = vmatprep.mubr.bf16.mxu0 %v427
        %955 = vmatmul.mubr.bf16.gmra.mxu0 %v426
        %v956 = vpop.f32.mrf.mxu0
        %v957 = vadd.f32 %v535, %v956
        %v958 = vpop.f32.mrf.mxu0
        %v959 = vadd.f32 %v539, %v958
        %v960 = vpop.f32.mrf.mxu0
        %v961 = vadd.f32 %v535, %v960
        %v962 = vpop.f32.mrf.mxu0
        %v963 = vadd.f32 %v539, %v962
        %964 = vmatprep.mubr.bf16.mxu0 %v431
        %965 = vmatmul.mubr.bf16.gmra.mxu0 %v430
        %v966 = vpop.f32.mrf.mxu0
        %v967 = vadd.f32 %v535, %v966
        %v968 = vpop.f32.mrf.mxu0
        %v969 = vadd.f32 %v539, %v968
        %v970 = vpop.f32.mrf.mxu0
        %v971 = vadd.f32 %v535, %v970
        %v972 = vpop.f32.mrf.mxu0
        %v973 = vadd.f32 %v539, %v972
        %974 = vmatprep.mubr.bf16.mxu0 %v435
        %975 = vmatmul.mubr.bf16.gmra.mxu0 %v434
        %v976 = vpop.f32.mrf.mxu0
        %v977 = vadd.f32 %v535, %v976
        %v978 = vpop.f32.mrf.mxu0
        %v979 = vadd.f32 %v539, %v978
        %v980 = vpop.f32.mrf.mxu0
        %v981 = vadd.f32 %v535, %v980
        %v982 = vpop.f32.mrf.mxu0
        %v983 = vadd.f32 %v539, %v982
        %984 = vmatprep.mubr.bf16.mxu0 %v439
        %985 = vmatmul.mubr.bf16.gmra.mxu0 %v438
        %v986 = vpop.f32.mrf.mxu0
        %v987 = vadd.f32 %v535, %v986
        %v988 = vpop.f32.mrf.mxu0
        %v989 = vadd.f32 %v539, %v988
        %v990 = vpop.f32.mrf.mxu0
        %v991 = vadd.f32 %v535, %v990
        %v992 = vpop.f32.mrf.mxu0
        %v993 = vadd.f32 %v539, %v992
        %994 = vmatprep.mubr.bf16.mxu0 %v443
        %995 = vmatmul.mubr.bf16.gmra.mxu0 %v442
        %v996 = vpop.f32.mrf.mxu0
        %v997 = vadd.f32 %v535, %v996
        %v998 = vpop.f32.mrf.mxu0
        %v999 = vadd.f32 %v539, %v998
        %v1000 = vpop.f32.mrf.mxu0
        %v1001 = vadd.f32 %v535, %v1000
        %v1002 = vpop.f32.mrf.mxu0
        %v1003 = vadd.f32 %v539, %v1002
        %1004 = vmatprep.mubr.bf16.mxu0 %v447
        %1005 = vmatmul.mubr.bf16.gmra.mxu0 %v446
        %v1006 = vpop.f32.mrf.mxu0
        %v1007 = vadd.f32 %v535, %v1006
        %v1008 = vpop.f32.mrf.mxu0
        %v1009 = vadd.f32 %v539, %v1008
        %v1010 = vpop.f32.mrf.mxu0
        %v1011 = vadd.f32 %v535, %v1010
        %v1012 = vpop.f32.mrf.mxu0
        %v1013 = vadd.f32 %v539, %v1012
        %1014 = vmatprep.mubr.bf16.mxu0 %v451
        %1015 = vmatmul.mubr.bf16.gmra.mxu0 %v450
        %v1016 = vpop.f32.mrf.mxu0
        %v1017 = vadd.f32 %v535, %v1016
        %v1018 = vpop.f32.mrf.mxu0
        %v1019 = vadd.f32 %v539, %v1018
        %v1020 = vpop.f32.mrf.mxu0
        %v1021 = vadd.f32 %v535, %v1020
        %v1022 = vpop.f32.mrf.mxu0
        %v1023 = vadd.f32 %v539, %v1022
        %1024 = vmatprep.mubr.bf16.mxu0 %v455
        %1025 = vmatmul.mubr.bf16.gmra.mxu0 %v454
        %v1026 = vpop.f32.mrf.mxu0
        %v1027 = vadd.f32 %v535, %v1026
        %v1028 = vpop.f32.mrf.mxu0
        %v1029 = vadd.f32 %v539, %v1028
        %v1030 = vpop.f32.mrf.mxu0
        %v1031 = vadd.f32 %v535, %v1030
        %v1032 = vpop.f32.mrf.mxu0
        %v1033 = vadd.f32 %v539, %v1032
        %1034 = vmatprep.mubr.bf16.mxu0 %v459
        %1035 = vmatmul.mubr.bf16.gmra.mxu0 %v458
        %v1036 = vpop.f32.mrf.mxu0
        %v1037 = vadd.f32 %v535, %v1036
        %v1038 = vpop.f32.mrf.mxu0
        %v1039 = vadd.f32 %v539, %v1038
        %v1040 = vpop.f32.mrf.mxu0
        %v1041 = vadd.f32 %v535, %v1040
        %v1042 = vpop.f32.mrf.mxu0
        %v1043 = vadd.f32 %v539, %v1042
        %1044 = vmatprep.mubr.bf16.mxu0 %v463
        %1045 = vmatmul.mubr.bf16.gmra.mxu0 %v462
        %v1046 = vpop.f32.mrf.mxu0
        %v1047 = vadd.f32 %v535, %v1046
        %v1048 = vpop.f32.mrf.mxu0
        %v1049 = vadd.f32 %v539, %v1048
        %v1050 = vpop.f32.mrf.mxu0
        %v1051 = vadd.f32 %v535, %v1050
        %v1052 = vpop.f32.mrf.mxu0
        %v1053 = vadd.f32 %v539, %v1052
        %1054 = vdwg.mxu0
        %1055 = vmatprep.subr.bf16.mxu0 %v781
        %1056 = vmatpush1.bf16.msra.mxu0 %v780
        %1057 = vmatprep.subr.bf16.mxu0 %v779
        %1058 = vmatpush1.bf16.msra.mxu0 %v778
        %1059 = vmatprep.subr.bf16.mxu0 %v777
        %1060 = vmatpush1.bf16.msra.mxu0 %v776
        %1061 = vmatprep.subr.bf16.mxu0 %v775
        %1062 = vmatpush1.bf16.msra.mxu0 %v774
        %1063 = vmatprep.subr.bf16.mxu0 %v773
        %1064 = vmatpush1.bf16.msra.mxu0 %v772
        %1065 = vmatprep.subr.bf16.mxu0 %v771
        %1066 = vmatpush1.bf16.msra.mxu0 %v770
        %1067 = vmatprep.subr.bf16.mxu0 %v769
        %1068 = vmatpush1.bf16.msra.mxu0 %v768
        %1069 = vmatprep.subr.bf16.mxu0 %v767
        %1070 = vmatpush1.bf16.msra.mxu0 %v766
        %1071 = vmatprep.subr.bf16.mxu0 %v797
        %1072 = vmatpush2.bf16.msra.mxu0 %v796
        %1073 = vmatprep.subr.bf16.mxu0 %v795
        %1074 = vmatpush2.bf16.msra.mxu0 %v794
        %1075 = vmatprep.subr.bf16.mxu0 %v793
        %1076 = vmatpush2.bf16.msra.mxu0 %v792
        %1077 = vmatprep.subr.bf16.mxu0 %v791
        %1078 = vmatpush2.bf16.msra.mxu0 %v790
        %1079 = vmatprep.subr.bf16.mxu0 %v789
        %1080 = vmatpush2.bf16.msra.mxu0 %v788
        %1081 = vmatprep.subr.bf16.mxu0 %v787
        %1082 = vmatpush2.bf16.msra.mxu0 %v786
        %1083 = vmatprep.subr.bf16.mxu0 %v785
        %1084 = vmatpush2.bf16.msra.mxu0 %v784
        %1085 = vmatprep.subr.bf16.mxu0 %v783
        %1086 = vmatpush2.bf16.msra.mxu0 %v782
        %1087 = vmatprep.mubr.bf16.mxu0 %v405
        %1088 = vmatmul.mubr.bf16.gmra.mxu0 %v404
        %v1089 = vpop.f32.mrf.mxu0
        %v1090 = vadd.f32 %v897, %v1089
        %v1091 = vpop.f32.mrf.mxu0
        %v1092 = vadd.f32 %v899, %v1091
        %v1093 = vpop.f32.mrf.mxu0
        %v1094 = vadd.f32 %v901, %v1093
        %v1095 = vpop.f32.mrf.mxu0
        %v1096 = vadd.f32 %v903, %v1095
        %1097 = vmatprep.mubr.bf16.mxu0 %v409
        %1098 = vmatmul.mubr.bf16.gmra.mxu0 %v408
        %v1099 = vpop.f32.mrf.mxu0
        %v1100 = vadd.f32 %v907, %v1099
        %v1101 = vpop.f32.mrf.mxu0
        %v1102 = vadd.f32 %v909, %v1101
        %v1103 = vpop.f32.mrf.mxu0
        %v1104 = vadd.f32 %v911, %v1103
        %v1105 = vpop.f32.mrf.mxu0
        %v1106 = vadd.f32 %v913, %v1105
        %1107 = vmatprep.mubr.bf16.mxu0 %v413
        %1108 = vmatmul.mubr.bf16.gmra.mxu0 %v412
        %v1109 = vpop.f32.mrf.mxu0
        %v1110 = vadd.f32 %v917, %v1109
        %v1111 = vpop.f32.mrf.mxu0
        %v1112 = vadd.f32 %v919, %v1111
        %v1113 = vpop.f32.mrf.mxu0
        %v1114 = vadd.f32 %v921, %v1113
        %v1115 = vpop.f32.mrf.mxu0
        %v1116 = vadd.f32 %v923, %v1115
        %1117 = vmatprep.mubr.bf16.mxu0 %v417
        %1118 = vmatmul.mubr.bf16.gmra.mxu0 %v416
        %v1119 = vpop.f32.mrf.mxu0
        %v1120 = vadd.f32 %v927, %v1119
        %v1121 = vpop.f32.mrf.mxu0
        %v1122 = vadd.f32 %v929, %v1121
        %v1123 = vpop.f32.mrf.mxu0
        %v1124 = vadd.f32 %v931, %v1123
        %v1125 = vpop.f32.mrf.mxu0
        %v1126 = vadd.f32 %v933, %v1125
        %1127 = vmatprep.mubr.bf16.mxu0 %v421
        %1128 = vmatmul.mubr.bf16.gmra.mxu0 %v420
        %v1129 = vpop.f32.mrf.mxu0
        %v1130 = vadd.f32 %v937, %v1129
        %v1131 = vpop.f32.mrf.mxu0
        %v1132 = vadd.f32 %v939, %v1131
        %v1133 = vpop.f32.mrf.mxu0
        %v1134 = vadd.f32 %v941, %v1133
        %v1135 = vpop.f32.mrf.mxu0
        %v1136 = vadd.f32 %v943, %v1135
        %1137 = vmatprep.mubr.bf16.mxu0 %v425
        %1138 = vmatmul.mubr.bf16.gmra.mxu0 %v424
        %v1139 = vpop.f32.mrf.mxu0
        %v1140 = vadd.f32 %v947, %v1139
        %v1141 = vpop.f32.mrf.mxu0
        %v1142 = vadd.f32 %v949, %v1141
        %v1143 = vpop.f32.mrf.mxu0
        %v1144 = vadd.f32 %v951, %v1143
        %v1145 = vpop.f32.mrf.mxu0
        %v1146 = vadd.f32 %v953, %v1145
        %1147 = vmatprep.mubr.bf16.mxu0 %v429
        %1148 = vmatmul.mubr.bf16.gmra.mxu0 %v428
        %v1149 = vpop.f32.mrf.mxu0
        %v1150 = vadd.f32 %v957, %v1149
        %v1151 = vpop.f32.mrf.mxu0
        %v1152 = vadd.f32 %v959, %v1151
        %v1153 = vpop.f32.mrf.mxu0
        %v1154 = vadd.f32 %v961, %v1153
        %v1155 = vpop.f32.mrf.mxu0
        %v1156 = vadd.f32 %v963, %v1155
        %1157 = vmatprep.mubr.bf16.mxu0 %v433
        %1158 = vmatmul.mubr.bf16.gmra.mxu0 %v432
        %v1159 = vpop.f32.mrf.mxu0
        %v1160 = vadd.f32 %v967, %v1159
        %v1161 = vpop.f32.mrf.mxu0
        %v1162 = vadd.f32 %v969, %v1161
        %v1163 = vpop.f32.mrf.mxu0
        %v1164 = vadd.f32 %v971, %v1163
        %v1165 = vpop.f32.mrf.mxu0
        %v1166 = vadd.f32 %v973, %v1165
        %1167 = vmatprep.mubr.bf16.mxu0 %v437
        %1168 = vmatmul.mubr.bf16.gmra.mxu0 %v436
        %v1169 = vpop.f32.mrf.mxu0
        %v1170 = vadd.f32 %v977, %v1169
        %v1171 = vpop.f32.mrf.mxu0
        %v1172 = vadd.f32 %v979, %v1171
        %v1173 = vpop.f32.mrf.mxu0
        %v1174 = vadd.f32 %v981, %v1173
        %v1175 = vpop.f32.mrf.mxu0
        %v1176 = vadd.f32 %v983, %v1175
        %1177 = vmatprep.mubr.bf16.mxu0 %v441
        %1178 = vmatmul.mubr.bf16.gmra.mxu0 %v440
        %v1179 = vpop.f32.mrf.mxu0
        %v1180 = vadd.f32 %v987, %v1179
        %v1181 = vpop.f32.mrf.mxu0
        %v1182 = vadd.f32 %v989, %v1181
        %v1183 = vpop.f32.mrf.mxu0
        %v1184 = vadd.f32 %v991, %v1183
        %v1185 = vpop.f32.mrf.mxu0
        %v1186 = vadd.f32 %v993, %v1185
        %1187 = vmatprep.mubr.bf16.mxu0 %v445
        %1188 = vmatmul.mubr.bf16.gmra.mxu0 %v444
        %v1189 = vpop.f32.mrf.mxu0
        %v1190 = vadd.f32 %v997, %v1189
        %v1191 = vpop.f32.mrf.mxu0
        %v1192 = vadd.f32 %v999, %v1191
        %v1193 = vpop.f32.mrf.mxu0
        %v1194 = vadd.f32 %v1001, %v1193
        %v1195 = vpop.f32.mrf.mxu0
        %v1196 = vadd.f32 %v1003, %v1195
        %1197 = vmatprep.mubr.bf16.mxu0 %v449
        %1198 = vmatmul.mubr.bf16.gmra.mxu0 %v448
        %v1199 = vpop.f32.mrf.mxu0
        %v1200 = vadd.f32 %v1007, %v1199
        %v1201 = vpop.f32.mrf.mxu0
        %v1202 = vadd.f32 %v1009, %v1201
        %v1203 = vpop.f32.mrf.mxu0
        %v1204 = vadd.f32 %v1011, %v1203
        %v1205 = vpop.f32.mrf.mxu0
        %v1206 = vadd.f32 %v1013, %v1205
        %1207 = vmatprep.mubr.bf16.mxu0 %v453
        %1208 = vmatmul.mubr.bf16.gmra.mxu0 %v452
        %v1209 = vpop.f32.mrf.mxu0
        %v1210 = vadd.f32 %v1017, %v1209
        %v1211 = vpop.f32.mrf.mxu0
        %v1212 = vadd.f32 %v1019, %v1211
        %v1213 = vpop.f32.mrf.mxu0
        %v1214 = vadd.f32 %v1021, %v1213
        %v1215 = vpop.f32.mrf.mxu0
        %v1216 = vadd.f32 %v1023, %v1215
        %1217 = vmatprep.mubr.bf16.mxu0 %v457
        %1218 = vmatmul.mubr.bf16.gmra.mxu0 %v456
        %v1219 = vpop.f32.mrf.mxu0
        %v1220 = vadd.f32 %v1027, %v1219
        %v1221 = vpop.f32.mrf.mxu0
        %v1222 = vadd.f32 %v1029, %v1221
        %v1223 = vpop.f32.mrf.mxu0
        %v1224 = vadd.f32 %v1031, %v1223
        %v1225 = vpop.f32.mrf.mxu0
        %v1226 = vadd.f32 %v1033, %v1225
        %1227 = vmatprep.mubr.bf16.mxu0 %v461
        %1228 = vmatmul.mubr.bf16.gmra.mxu0 %v460
        %v1229 = vpop.f32.mrf.mxu0
        %v1230 = vadd.f32 %v1037, %v1229
        %v1231 = vpop.f32.mrf.mxu0
        %v1232 = vadd.f32 %v1039, %v1231
        %v1233 = vpop.f32.mrf.mxu0
        %v1234 = vadd.f32 %v1041, %v1233
        %v1235 = vpop.f32.mrf.mxu0
        %v1236 = vadd.f32 %v1043, %v1235
        %1237 = vmatprep.mubr.bf16.mxu0 %v465
        %1238 = vmatmul.mubr.bf16.gmra.mxu0 %v464
        %v1239 = vpop.f32.mrf.mxu0
        %v1240 = vadd.f32 %v1047, %v1239
        %v1241 = vpop.f32.mrf.mxu0
        %v1242 = vadd.f32 %v1049, %v1241
        %v1243 = vpop.f32.mrf.mxu0
        %v1244 = vadd.f32 %v1051, %v1243
        %v1245 = vpop.f32.mrf.mxu0
        %v1246 = vadd.f32 %v1053, %v1245
        %1247 = vdwg.mxu0
        %v1248 = vmax.f32 %v1090, 0.0
        %v1249 = vmax.f32 %v1092, 0.0
        %v1250 = vmax.f32 %v1094, 0.0
        %v1251 = vmax.f32 %v1096, 0.0
        %v1252 = vmax.f32 %v1100, 0.0
        %v1253 = vmax.f32 %v1102, 0.0
        %v1254 = vmax.f32 %v1104, 0.0
        %v1255 = vmax.f32 %v1106, 0.0
        %v1256 = vmax.f32 %v1110, 0.0
        %v1257 = vmax.f32 %v1112, 0.0
        %v1258 = vmax.f32 %v1114, 0.0
        %v1259 = vmax.f32 %v1116, 0.0
        %v1260 = vmax.f32 %v1120, 0.0
        %v1261 = vmax.f32 %v1122, 0.0
        %v1262 = vmax.f32 %v1124, 0.0
        %v1263 = vmax.f32 %v1126, 0.0
        %v1264 = vmax.f32 %v1130, 0.0
        %v1265 = vmax.f32 %v1132, 0.0
        %v1266 = vmax.f32 %v1134, 0.0
        %v1267 = vmax.f32 %v1136, 0.0
        %v1268 = vmax.f32 %v1140, 0.0
        %v1269 = vmax.f32 %v1142, 0.0
        %v1270 = vmax.f32 %v1144, 0.0
        %v1271 = vmax.f32 %v1146, 0.0
        %v1272 = vmax.f32 %v1150, 0.0
        %v1273 = vmax.f32 %v1152, 0.0
        %v1274 = vmax.f32 %v1154, 0.0
        %v1275 = vmax.f32 %v1156, 0.0
        %v1276 = vmax.f32 %v1160, 0.0
        %v1277 = vmax.f32 %v1162, 0.0
        %v1278 = vmax.f32 %v1164, 0.0
        %v1279 = vmax.f32 %v1166, 0.0
        %v1280 = vmax.f32 %v1170, 0.0
        %v1281 = vmax.f32 %v1172, 0.0
        %v1282 = vmax.f32 %v1174, 0.0
        %v1283 = vmax.f32 %v1176, 0.0
        %v1284 = vmax.f32 %v1180, 0.0
        %v1285 = vmax.f32 %v1182, 0.0
        %v1286 = vmax.f32 %v1184, 0.0
        %v1287 = vmax.f32 %v1186, 0.0
        %v1288 = vmax.f32 %v1190, 0.0
        %v1289 = vmax.f32 %v1192, 0.0
        %v1290 = vmax.f32 %v1194, 0.0
        %v1291 = vmax.f32 %v1196, 0.0
        %v1292 = vmax.f32 %v1200, 0.0
        %v1293 = vmax.f32 %v1202, 0.0
        %v1294 = vmax.f32 %v1204, 0.0
        %v1295 = vmax.f32 %v1206, 0.0
        %v1296 = vmax.f32 %v1210, 0.0
        %v1297 = vmax.f32 %v1212, 0.0
        %v1298 = vmax.f32 %v1214, 0.0
        %v1299 = vmax.f32 %v1216, 0.0
        %v1300 = vmax.f32 %v1220, 0.0
        %v1301 = vmax.f32 %v1222, 0.0
        %v1302 = vmax.f32 %v1224, 0.0
        %v1303 = vmax.f32 %v1226, 0.0
        %v1304 = vmax.f32 %v1230, 0.0
        %v1305 = vmax.f32 %v1232, 0.0
        %v1306 = vmax.f32 %v1234, 0.0
        %v1307 = vmax.f32 %v1236, 0.0
        %v1308 = vmax.f32 %v1240, 0.0
        %v1309 = vmax.f32 %v1242, 0.0
        %v1310 = vmax.f32 %v1244, 0.0
        %v1311 = vmax.f32 %v1246, 0.0
        %v1312 = vpack.c.bf16 %v1250, %v1248
        %v1313 = vpack.c.bf16 %v1251, %v1249
        %v1314 = vpack.c.bf16 %v1254, %v1252
        %v1315 = vpack.c.bf16 %v1255, %v1253
        %v1316 = vpack.c.bf16 %v1258, %v1256
        %v1317 = vpack.c.bf16 %v1259, %v1257
        %v1318 = vpack.c.bf16 %v1262, %v1260
        %v1319 = vpack.c.bf16 %v1263, %v1261
        %v1320 = vpack.c.bf16 %v1266, %v1264
        %v1321 = vpack.c.bf16 %v1267, %v1265
        %v1322 = vpack.c.bf16 %v1270, %v1268
        %v1323 = vpack.c.bf16 %v1271, %v1269
        %v1324 = vpack.c.bf16 %v1274, %v1272
        %v1325 = vpack.c.bf16 %v1275, %v1273
        %v1326 = vpack.c.bf16 %v1278, %v1276
        %v1327 = vpack.c.bf16 %v1279, %v1277
        %v1328 = vpack.c.bf16 %v1282, %v1280
        %v1329 = vpack.c.bf16 %v1283, %v1281
        %v1330 = vpack.c.bf16 %v1286, %v1284
        %v1331 = vpack.c.bf16 %v1287, %v1285
        %v1332 = vpack.c.bf16 %v1290, %v1288
        %v1333 = vpack.c.bf16 %v1291, %v1289
        %v1334 = vpack.c.bf16 %v1294, %v1292
        %v1335 = vpack.c.bf16 %v1295, %v1293
        %v1336 = vpack.c.bf16 %v1298, %v1296
        %v1337 = vpack.c.bf16 %v1299, %v1297
        %v1338 = vpack.c.bf16 %v1302, %v1300
        %v1339 = vpack.c.bf16 %v1303, %v1301
        %v1340 = vpack.c.bf16 %v1306, %v1304
        %v1341 = vpack.c.bf16 %v1307, %v1305
        %v1342 = vpack.c.bf16 %v1310, %v1308
        %v1343 = vpack.c.bf16 %v1311, %v1309
        %v1344 = vld [vmem:[%s3] sm:$0xf]
        %v1345 = vld [vmem:[%s3 + $0x4] sm:$0xf]
        %v1346 = vld [vmem:[%s3 + $0x8] sm:$0xf]
        %v1347 = vld [vmem:[%s3 + $0xc] sm:$0xf]
        %v1348 = vld [vmem:[%s3 + $0x10] sm:$0xf]
        %v1349 = vld [vmem:[%s3 + $0x14] sm:$0xf]
        %v1350 = vld [vmem:[%s3 + $0x18] sm:$0xf]
        %v1351 = vld [vmem:[%s3 + $0x1c] sm:$0xf]
        %v1352 = vld [vmem:[%s3 + $0x20] sm:$0xf]
        %v1353 = vld [vmem:[%s3 + $0x24] sm:$0xf]
        %v1354 = vld [vmem:[%s3 + $0x28] sm:$0xf]
        %v1355 = vld [vmem:[%s3 + $0x2c] sm:$0xf]
        %v1356 = vld [vmem:[%s3 + $0x30] sm:$0xf]
        %v1357 = vld [vmem:[%s3 + $0x34] sm:$0xf]
        %v1358 = vld [vmem:[%s3 + $0x38] sm:$0xf]
        %v1359 = vld [vmem:[%s3 + $0x3c] sm:$0xf]
        %v1360 = vld [vmem:[%s3 + $0x40] sm:$0xf]
        %v1361 = vld [vmem:[%s3 + $0x44] sm:$0xf]
        %v1362 = vld [vmem:[%s3 + $0x48] sm:$0xf]
        %v1363 = vld [vmem:[%s3 + $0x4c] sm:$0xf]
        %v1364 = vld [vmem:[%s3 + $0x50] sm:$0xf]
        %v1365 = vld [vmem:[%s3 + $0x54] sm:$0xf]
        %v1366 = vld [vmem:[%s3 + $0x58] sm:$0xf]
        %v1367 = vld [vmem:[%s3 + $0x5c] sm:$0xf]
        %v1368 = vld [vmem:[%s3 + $0x60] sm:$0xf]
        %v1369 = vld [vmem:[%s3 + $0x64] sm:$0xf]
        %v1370 = vld [vmem:[%s3 + $0x68] sm:$0xf]
        %v1371 = vld [vmem:[%s3 + $0x6c] sm:$0xf]
        %v1372 = vld [vmem:[%s3 + $0x70] sm:$0xf]
        %v1373 = vld [vmem:[%s3 + $0x74] sm:$0xf]
        %v1374 = vld [vmem:[%s3 + $0x78] sm:$0xf]
        %v1375 = vld [vmem:[%s3 + $0x7c] sm:$0xf]
        %v1376 = vld [vmem:[%s4] sm:$0x1]
        %v1378 = vlaneseq
        %v1379 = vshrl.u32 %v1378, 7
        %v1380 = vsub.s32 0, %v1379
        %v1381 = vrot.slane %v1376, %v1380
        %v1415 = vunpack.c.l.b16 %v1344
        %v1416 = vunpack.c.l.b16 %v1345
        %v1417 = vunpack.c.l.b16 %v1346
        %v1418 = vunpack.c.l.b16 %v1347
        %v1419 = vunpack.c.l.b16 %v1348
        %v1420 = vunpack.c.l.b16 %v1349
        %v1421 = vunpack.c.l.b16 %v1350
        %v1422 = vunpack.c.l.b16 %v1351
        %v1423 = vunpack.c.l.b16 %v1352
        %v1424 = vunpack.c.l.b16 %v1353
        %v1425 = vunpack.c.l.b16 %v1354
        %v1426 = vunpack.c.l.b16 %v1355
        %v1427 = vunpack.c.l.b16 %v1356
        %v1428 = vunpack.c.l.b16 %v1357
        %v1429 = vunpack.c.l.b16 %v1358
        %v1430 = vunpack.c.l.b16 %v1359
        %v1431 = vunpack.c.l.b16 %v1360
        %v1432 = vunpack.c.l.b16 %v1361
        %v1433 = vunpack.c.l.b16 %v1362
        %v1434 = vunpack.c.l.b16 %v1363
        %v1435 = vunpack.c.l.b16 %v1364
        %v1436 = vunpack.c.l.b16 %v1365
        %v1437 = vunpack.c.l.b16 %v1366
        %v1438 = vunpack.c.l.b16 %v1367
        %v1439 = vunpack.c.l.b16 %v1368
        %v1440 = vunpack.c.l.b16 %v1369
        %v1441 = vunpack.c.l.b16 %v1370
        %v1442 = vunpack.c.l.b16 %v1371
        %v1443 = vunpack.c.l.b16 %v1372
        %v1444 = vunpack.c.l.b16 %v1373
        %v1445 = vunpack.c.l.b16 %v1374
        %v1446 = vunpack.c.l.b16 %v1375
        %v1447 = vpack.c.b16 %v1416, %v1415
        %v1448 = vpack.c.b16 %v1418, %v1417
        %v1449 = vpack.c.b16 %v1420, %v1419
        %v1450 = vpack.c.b16 %v1422, %v1421
        %v1451 = vpack.c.b16 %v1424, %v1423
        %v1452 = vpack.c.b16 %v1426, %v1425
        %v1453 = vpack.c.b16 %v1428, %v1427
        %v1454 = vpack.c.b16 %v1430, %v1429
        %v1455 = vpack.c.b16 %v1432, %v1431
        %v1456 = vpack.c.b16 %v1434, %v1433
        %v1457 = vpack.c.b16 %v1436, %v1435
        %v1458 = vpack.c.b16 %v1438, %v1437
        %v1459 = vpack.c.b16 %v1440, %v1439
        %v1460 = vpack.c.b16 %v1442, %v1441
        %v1461 = vpack.c.b16 %v1444, %v1443
        %v1462 = vpack.c.b16 %v1446, %v1445
        %1479 = vmatprep.subr.bf16.mxu0 0
        %1480 = vmatpush1.bf16.msra.mxu0 %v1454
        %1481 = vmatprep.subr.bf16.mxu0 0
        %1482 = vmatpush1.bf16.msra.mxu0 %v1453
        %1483 = vmatprep.subr.bf16.mxu0 0
        %1484 = vmatpush1.bf16.msra.mxu0 %v1452
        %1485 = vmatprep.subr.bf16.mxu0 0
        %1486 = vmatpush1.bf16.msra.mxu0 %v1451
        %1487 = vmatprep.subr.bf16.mxu0 0
        %1488 = vmatpush1.bf16.msra.mxu0 %v1450
        %1489 = vmatprep.subr.bf16.mxu0 0
        %1490 = vmatpush1.bf16.msra.mxu0 %v1449
        %1491 = vmatprep.subr.bf16.mxu0 0
        %1492 = vmatpush1.bf16.msra.mxu0 %v1448
        %1493 = vmatprep.subr.bf16.mxu0 0
        %1494 = vmatpush1.bf16.msra.mxu0 %v1447
        %1495 = vmatprep.subr.bf16.mxu0 0
        %1496 = vmatpush2.bf16.msra.mxu0 %v1462
        %1497 = vmatprep.subr.bf16.mxu0 0
        %1498 = vmatpush2.bf16.msra.mxu0 %v1461
        %1499 = vmatprep.subr.bf16.mxu0 0
        %1500 = vmatpush2.bf16.msra.mxu0 %v1460
        %1501 = vmatprep.subr.bf16.mxu0 0
        %1502 = vmatpush2.bf16.msra.mxu0 %v1459
        %1503 = vmatprep.subr.bf16.mxu0 0
        %1504 = vmatpush2.bf16.msra.mxu0 %v1458
        %1505 = vmatprep.subr.bf16.mxu0 0
        %1506 = vmatpush2.bf16.msra.mxu0 %v1457
        %1507 = vmatprep.subr.bf16.mxu0 0
        %1508 = vmatpush2.bf16.msra.mxu0 %v1456
        %1509 = vmatprep.subr.bf16.mxu0 0
        %1510 = vmatpush2.bf16.msra.mxu0 %v1455
        %1511 = vmatprep.mubr.bf16.mxu0 %v1313
        %1512 = vmatmul.mubr.bf16.gmra.mxu0 %v1312
        %v1513 = vpop.f32.mrf.mxu0
        %v1514 = vadd.f32 %v1381, %v1513
        %v1515 = vpop.f32.mrf.mxu0
        %v1516 = vpop.f32.mrf.mxu0
        %v1517 = vadd.f32 %v1381, %v1516
        %v1518 = vpop.f32.mrf.mxu0
        %1519 = vmatprep.mubr.bf16.mxu0 %v1315
        %1520 = vmatmul.mubr.bf16.gmra.mxu0 %v1314
        %v1521 = vpop.f32.mrf.mxu0
        %v1522 = vadd.f32 %v1381, %v1521
        %v1523 = vpop.f32.mrf.mxu0
        %v1524 = vpop.f32.mrf.mxu0
        %v1525 = vadd.f32 %v1381, %v1524
        %v1526 = vpop.f32.mrf.mxu0
        %1527 = vmatprep.mubr.bf16.mxu0 %v1317
        %1528 = vmatmul.mubr.bf16.gmra.mxu0 %v1316
        %v1529 = vpop.f32.mrf.mxu0
        %v1530 = vadd.f32 %v1381, %v1529
        %v1531 = vpop.f32.mrf.mxu0
        %v1532 = vpop.f32.mrf.mxu0
        %v1533 = vadd.f32 %v1381, %v1532
        %v1534 = vpop.f32.mrf.mxu0
        %1535 = vmatprep.mubr.bf16.mxu0 %v1319
        %1536 = vmatmul.mubr.bf16.gmra.mxu0 %v1318
        %v1537 = vpop.f32.mrf.mxu0
        %v1538 = vadd.f32 %v1381, %v1537
        %v1539 = vpop.f32.mrf.mxu0
        %v1540 = vpop.f32.mrf.mxu0
        %v1541 = vadd.f32 %v1381, %v1540
        %v1542 = vpop.f32.mrf.mxu0
        %1543 = vmatprep.mubr.bf16.mxu0 %v1321
        %1544 = vmatmul.mubr.bf16.gmra.mxu0 %v1320
        %v1545 = vpop.f32.mrf.mxu0
        %v1546 = vadd.f32 %v1381, %v1545
        %v1547 = vpop.f32.mrf.mxu0
        %v1548 = vpop.f32.mrf.mxu0
        %v1549 = vadd.f32 %v1381, %v1548
        %v1550 = vpop.f32.mrf.mxu0
        %1551 = vmatprep.mubr.bf16.mxu0 %v1323
        %1552 = vmatmul.mubr.bf16.gmra.mxu0 %v1322
        %v1553 = vpop.f32.mrf.mxu0
        %v1554 = vadd.f32 %v1381, %v1553
        %v1555 = vpop.f32.mrf.mxu0
        %v1556 = vpop.f32.mrf.mxu0
        %v1557 = vadd.f32 %v1381, %v1556
        %v1558 = vpop.f32.mrf.mxu0
        %1559 = vmatprep.mubr.bf16.mxu0 %v1325
        %1560 = vmatmul.mubr.bf16.gmra.mxu0 %v1324
        %v1561 = vpop.f32.mrf.mxu0
        %v1562 = vadd.f32 %v1381, %v1561
        %v1563 = vpop.f32.mrf.mxu0
        %v1564 = vpop.f32.mrf.mxu0
        %v1565 = vadd.f32 %v1381, %v1564
        %v1566 = vpop.f32.mrf.mxu0
        %1567 = vmatprep.mubr.bf16.mxu0 %v1327
        %1568 = vmatmul.mubr.bf16.gmra.mxu0 %v1326
        %v1569 = vpop.f32.mrf.mxu0
        %v1570 = vadd.f32 %v1381, %v1569
        %v1571 = vpop.f32.mrf.mxu0
        %v1572 = vpop.f32.mrf.mxu0
        %v1573 = vadd.f32 %v1381, %v1572
        %v1574 = vpop.f32.mrf.mxu0
        %1575 = vmatprep.mubr.bf16.mxu0 %v1329
        %1576 = vmatmul.mubr.bf16.gmra.mxu0 %v1328
        %v1577 = vpop.f32.mrf.mxu0
        %v1578 = vadd.f32 %v1381, %v1577
        %v1579 = vpop.f32.mrf.mxu0
        %v1580 = vpop.f32.mrf.mxu0
        %v1581 = vadd.f32 %v1381, %v1580
        %v1582 = vpop.f32.mrf.mxu0
        %1583 = vmatprep.mubr.bf16.mxu0 %v1331
        %1584 = vmatmul.mubr.bf16.gmra.mxu0 %v1330
        %v1585 = vpop.f32.mrf.mxu0
        %v1586 = vadd.f32 %v1381, %v1585
        %v1587 = vpop.f32.mrf.mxu0
        %v1588 = vpop.f32.mrf.mxu0
        %v1589 = vadd.f32 %v1381, %v1588
        %v1590 = vpop.f32.mrf.mxu0
        %1591 = vmatprep.mubr.bf16.mxu0 %v1333
        %1592 = vmatmul.mubr.bf16.gmra.mxu0 %v1332
        %v1593 = vpop.f32.mrf.mxu0
        %v1594 = vadd.f32 %v1381, %v1593
        %v1595 = vpop.f32.mrf.mxu0
        %v1596 = vpop.f32.mrf.mxu0
        %v1597 = vadd.f32 %v1381, %v1596
        %v1598 = vpop.f32.mrf.mxu0
        %1599 = vmatprep.mubr.bf16.mxu0 %v1335
        %1600 = vmatmul.mubr.bf16.gmra.mxu0 %v1334
        %v1601 = vpop.f32.mrf.mxu0
        %v1602 = vadd.f32 %v1381, %v1601
        %v1603 = vpop.f32.mrf.mxu0
        %v1604 = vpop.f32.mrf.mxu0
        %v1605 = vadd.f32 %v1381, %v1604
        %v1606 = vpop.f32.mrf.mxu0
        %1607 = vmatprep.mubr.bf16.mxu0 %v1337
        %1608 = vmatmul.mubr.bf16.gmra.mxu0 %v1336
        %v1609 = vpop.f32.mrf.mxu0
        %v1610 = vadd.f32 %v1381, %v1609
        %v1611 = vpop.f32.mrf.mxu0
        %v1612 = vpop.f32.mrf.mxu0
        %v1613 = vadd.f32 %v1381, %v1612
        %v1614 = vpop.f32.mrf.mxu0
        %1615 = vmatprep.mubr.bf16.mxu0 %v1339
        %1616 = vmatmul.mubr.bf16.gmra.mxu0 %v1338
        %v1617 = vpop.f32.mrf.mxu0
        %v1618 = vadd.f32 %v1381, %v1617
        %v1619 = vpop.f32.mrf.mxu0
        %v1620 = vpop.f32.mrf.mxu0
        %v1621 = vadd.f32 %v1381, %v1620
        %v1622 = vpop.f32.mrf.mxu0
        %1623 = vmatprep.mubr.bf16.mxu0 %v1341
        %1624 = vmatmul.mubr.bf16.gmra.mxu0 %v1340
        %v1625 = vpop.f32.mrf.mxu0
        %v1626 = vadd.f32 %v1381, %v1625
        %v1627 = vpop.f32.mrf.mxu0
        %v1628 = vpop.f32.mrf.mxu0
        %v1629 = vadd.f32 %v1381, %v1628
        %v1630 = vpop.f32.mrf.mxu0
        %1631 = vmatprep.mubr.bf16.mxu0 %v1343
        %1632 = vmatmul.mubr.bf16.gmra.mxu0 %v1342
        %v1633 = vpop.f32.mrf.mxu0
        %v1634 = vadd.f32 %v1381, %v1633
        %v1635 = vpop.f32.mrf.mxu0
        %v1636 = vpop.f32.mrf.mxu0
        %v1637 = vadd.f32 %v1381, %v1636
        %v1638 = vpop.f32.mrf.mxu0
        %1639 = vdwg.mxu0
        %vm1640 = vcmask 15360
        %1641 = vst.msk [vmem:[%s261] sm:$0xff] %vm1640, %v1514
        %1642 = vst.msk [vmem:[%s261 + $0x8] sm:$0xff] %vm1640, %v1517
        %1643 = vst.msk [vmem:[%s261 + $0x10] sm:$0xff] %vm1640, %v1522
        %1644 = vst.msk [vmem:[%s261 + $0x18] sm:$0xff] %vm1640, %v1525
        %1645 = vst.msk [vmem:[%s261 + $0x20] sm:$0xff] %vm1640, %v1530
        %1646 = vst.msk [vmem:[%s261 + $0x28] sm:$0xff] %vm1640, %v1533
        %1647 = vst.msk [vmem:[%s261 + $0x30] sm:$0xff] %vm1640, %v1538
        %1648 = vst.msk [vmem:[%s261 + $0x38] sm:$0xff] %vm1640, %v1541
        %1649 = vst.msk [vmem:[%s261 + $0x40] sm:$0xff] %vm1640, %v1546
        %1650 = vst.msk [vmem:[%s261 + $0x48] sm:$0xff] %vm1640, %v1549
        %1651 = vst.msk [vmem:[%s261 + $0x50] sm:$0xff] %vm1640, %v1554
        %1652 = vst.msk [vmem:[%s261 + $0x58] sm:$0xff] %vm1640, %v1557
        %1653 = vst.msk [vmem:[%s261 + $0x60] sm:$0xff] %vm1640, %v1562
        %1654 = vst.msk [vmem:[%s261 + $0x68] sm:$0xff] %vm1640, %v1565
        %1655 = vst.msk [vmem:[%s261 + $0x70] sm:$0xff] %vm1640, %v1570
        %1656 = vst.msk [vmem:[%s261 + $0x78] sm:$0xff] %vm1640, %v1573
        %1657 = vst.msk [vmem:[%s261 + $0x80] sm:$0xff] %vm1640, %v1578
        %1658 = vst.msk [vmem:[%s261 + $0x88] sm:$0xff] %vm1640, %v1581
        %1659 = vst.msk [vmem:[%s261 + $0x90] sm:$0xff] %vm1640, %v1586
        %1660 = vst.msk [vmem:[%s261 + $0x98] sm:$0xff] %vm1640, %v1589
        %1661 = vst.msk [vmem:[%s261 + $0xa0] sm:$0xff] %vm1640, %v1594
        %1662 = vst.msk [vmem:[%s261 + $0xa8] sm:$0xff] %vm1640, %v1597
        %1663 = vst.msk [vmem:[%s261 + $0xb0] sm:$0xff] %vm1640, %v1602
        %1664 = vst.msk [vmem:[%s261 + $0xb8] sm:$0xff] %vm1640, %v1605
        %1665 = vst.msk [vmem:[%s261 + $0xc0] sm:$0xff] %vm1640, %v1610
        %1666 = vst.msk [vmem:[%s261 + $0xc8] sm:$0xff] %vm1640, %v1613
        %1667 = vst.msk [vmem:[%s261 + $0xd0] sm:$0xff] %vm1640, %v1618
        %1668 = vst.msk [vmem:[%s261 + $0xd8] sm:$0xff] %vm1640, %v1621
        %1669 = vst.msk [vmem:[%s261 + $0xe0] sm:$0xff] %vm1640, %v1626
        %1670 = vst.msk [vmem:[%s261 + $0xe8] sm:$0xff] %vm1640, %v1629
        %1671 = vst.msk [vmem:[%s261 + $0xf0] sm:$0xff] %vm1640, %v1634
        %1672 = vst.msk [vmem:[%s261 + $0xf8] sm:$0xff] %vm1640, %v1637
        %s1673 = sand.u32 %s138, 1
        %s1674 = sand.u32 %s138, 1
        %s1675 = smul.addr %s1674, 256
        %s1676 = scalar_lea.vmem [#allocation6], %s1675
        // Predicated region
        $region49: #{tpu_custom_call.1} parent=39 // pred_check
          %p1677 = pneg %p148
        $region50: #{tpu_custom_call.1} parent=39 // pred_check_branch
          %1679 = sbr.rel (%p1677) target = $region52
        $region51: #{tpu_custom_call.1} parent=39 // pred_region
          %s1680 = smul.u32 32, %s20
          %s1681 = ssub.s32 38, %s1680
          %p1682 = scmp.lt.s32.totalorder %s1681, 32
          %s1683 = scalar_select %p1682, %s1681, 32
          %s1684 = smul.u32 128, %s1683
          %p1685 = scmp.ne.s32.totalorder 0, %s1684
          %s1686 = smul.addr %s1680, 8
          %s1687 = scalar_lea.vmem %s5, %s1686
          // Predicated region
          $region53: #{tpu_custom_call.1} parent=51 // pred_check
            %p1688 = pneg %p1685
          $region54: #{tpu_custom_call.1} parent=51 // pred_check_branch
            %1690 = sbr.rel (%p1688) target = $region56
          $region55: #{tpu_custom_call.1} parent=51 // pred_region
            // Predicated region
            $region57: #{tpu_custom_call.1} parent=55 // pred_check
              _
            $region58: #{tpu_custom_call.1} parent=55 // pred_check_branch
              %1692 = sbr.rel (0) target = $region60
            $region59: #{tpu_custom_call.1} parent=55 // pred_region
              // Predicated region
              $region79: #{tpu_custom_call.1} parent=59 // pred_check
                _
              $region80: #{tpu_custom_call.1} parent=59 // pred_check_branch
                %1804 = sbr.rel (0) target = $region82
              $region81: #{tpu_custom_call.1} parent=59 // pred_region
                %s1805 = sshrl.u32 %s1683, 5
                // While loop
                $region83: #{tpu_custom_call.1} parent=81 // loop_pre_header
                  _
                $region84: #{tpu_custom_call.1} parent=81 // loop_header
                  %s1807 = sphi 0, %s1809
                  %p1808 = scmp.ge.s32.totalorder %s1807, %s1805
                  %s1812 = sphi 0, %s1881
                  %s1813 = sphi %s1676, %s1884
                  %s1814 = sphi %s1687, %s1885
                $region85: #{tpu_custom_call.1} parent=81 // loop_header_branch
                  %1811 = sbr.rel (%p1808) target = $region89
                $region86: #{tpu_custom_call.1} parent=81 // loop_body
                  %v1815 = vld [vmem:[%s1813] sm:$0xff]
                  %1816 = vst [vmem:[%s1814] sm:$0xff] %v1815
                  %v1817 = vld [vmem:[%s1813 + $0x8] sm:$0xff]
                  %1818 = vst [vmem:[%s1814 + $0x8] sm:$0xff] %v1817
                  %v1819 = vld [vmem:[%s1813 + $0x10] sm:$0xff]
                  %1820 = vst [vmem:[%s1814 + $0x10] sm:$0xff] %v1819
                  %v1821 = vld [vmem:[%s1813 + $0x18] sm:$0xff]
                  %1822 = vst [vmem:[%s1814 + $0x18] sm:$0xff] %v1821
                  %v1823 = vld [vmem:[%s1813 + $0x20] sm:$0xff]
                  %1824 = vst [vmem:[%s1814 + $0x20] sm:$0xff] %v1823
                  %v1825 = vld [vmem:[%s1813 + $0x28] sm:$0xff]
                  %1826 = vst [vmem:[%s1814 + $0x28] sm:$0xff] %v1825
                  %v1827 = vld [vmem:[%s1813 + $0x30] sm:$0xff]
                  %1828 = vst [vmem:[%s1814 + $0x30] sm:$0xff] %v1827
                  %v1829 = vld [vmem:[%s1813 + $0x38] sm:$0xff]
                  %1830 = vst [vmem:[%s1814 + $0x38] sm:$0xff] %v1829
                  %v1831 = vld [vmem:[%s1813 + $0x40] sm:$0xff]
                  %1832 = vst [vmem:[%s1814 + $0x40] sm:$0xff] %v1831
                  %v1833 = vld [vmem:[%s1813 + $0x48] sm:$0xff]
                  %1834 = vst [vmem:[%s1814 + $0x48] sm:$0xff] %v1833
                  %v1835 = vld [vmem:[%s1813 + $0x50] sm:$0xff]
                  %1836 = vst [vmem:[%s1814 + $0x50] sm:$0xff] %v1835
                  %v1837 = vld [vmem:[%s1813 + $0x58] sm:$0xff]
                  %1838 = vst [vmem:[%s1814 + $0x58] sm:$0xff] %v1837
                  %v1839 = vld [vmem:[%s1813 + $0x60] sm:$0xff]
                  %1840 = vst [vmem:[%s1814 + $0x60] sm:$0xff] %v1839
                  %v1841 = vld [vmem:[%s1813 + $0x68] sm:$0xff]
                  %1842 = vst [vmem:[%s1814 + $0x68] sm:$0xff] %v1841
                  %v1843 = vld [vmem:[%s1813 + $0x70] sm:$0xff]
                  %1844 = vst [vmem:[%s1814 + $0x70] sm:$0xff] %v1843
                  %v1845 = vld [vmem:[%s1813 + $0x78] sm:$0xff]
                  %1846 = vst [vmem:[%s1814 + $0x78] sm:$0xff] %v1845
                  %v1847 = vld [vmem:[%s1813 + $0x80] sm:$0xff]
                  %1848 = vst [vmem:[%s1814 + $0x80] sm:$0xff] %v1847
                  %v1849 = vld [vmem:[%s1813 + $0x88] sm:$0xff]
                  %1850 = vst [vmem:[%s1814 + $0x88] sm:$0xff] %v1849
                  %v1851 = vld [vmem:[%s1813 + $0x90] sm:$0xff]
                  %1852 = vst [vmem:[%s1814 + $0x90] sm:$0xff] %v1851
                  %v1853 = vld [vmem:[%s1813 + $0x98] sm:$0xff]
                  %1854 = vst [vmem:[%s1814 + $0x98] sm:$0xff] %v1853
                  %v1855 = vld [vmem:[%s1813 + $0xa0] sm:$0xff]
                  %1856 = vst [vmem:[%s1814 + $0xa0] sm:$0xff] %v1855
                  %v1857 = vld [vmem:[%s1813 + $0xa8] sm:$0xff]
                  %1858 = vst [vmem:[%s1814 + $0xa8] sm:$0xff] %v1857
                  %v1859 = vld [vmem:[%s1813 + $0xb0] sm:$0xff]
                  %1860 = vst [vmem:[%s1814 + $0xb0] sm:$0xff] %v1859
                  %v1861 = vld [vmem:[%s1813 + $0xb8] sm:$0xff]
                  %1862 = vst [vmem:[%s1814 + $0xb8] sm:$0xff] %v1861
                  %v1863 = vld [vmem:[%s1813 + $0xc0] sm:$0xff]
                  %1864 = vst [vmem:[%s1814 + $0xc0] sm:$0xff] %v1863
                  %v1865 = vld [vmem:[%s1813 + $0xc8] sm:$0xff]
                  %1866 = vst [vmem:[%s1814 + $0xc8] sm:$0xff] %v1865
                  %v1867 = vld [vmem:[%s1813 + $0xd0] sm:$0xff]
                  %1868 = vst [vmem:[%s1814 + $0xd0] sm:$0xff] %v1867
                  %v1869 = vld [vmem:[%s1813 + $0xd8] sm:$0xff]
                  %1870 = vst [vmem:[%s1814 + $0xd8] sm:$0xff] %v1869
                  %v1871 = vld [vmem:[%s1813 + $0xe0] sm:$0xff]
                  %1872 = vst [vmem:[%s1814 + $0xe0] sm:$0xff] %v1871
                  %v1873 = vld [vmem:[%s1813 + $0xe8] sm:$0xff]
                  %1874 = vst [vmem:[%s1814 + $0xe8] sm:$0xff] %v1873
                  %v1875 = vld [vmem:[%s1813 + $0xf0] sm:$0xff]
                  %1876 = vst [vmem:[%s1814 + $0xf0] sm:$0xff] %v1875
                  %v1877 = vld [vmem:[%s1813 + $0xf8] sm:$0xff]
                  %1878 = vst [vmem:[%s1814 + $0xf8] sm:$0xff] %v1877
                  %s1879 = sadd.s32 1, %s1812
                  %p1880 = scmp.ge.s32.totalorder %s1879, %s1805
                  %s1881 = scalar_select %p1880, 0, %s1879
                  %s1882 = smul.u32 %s1881, 256
                  %s1883 = smul.u32 %s1881, 256
                  %s1884 = scalar_lea.vmem %s1676, %s1882 [#allocation6]
                  %s1885 = scalar_lea.vmem %s1687, %s1883
                $region87: #{tpu_custom_call.1} parent=81 // loop_footer
                  %s1809 = sadd.s32 %s1807, 1
                $region88: #{tpu_custom_call.1} parent=81 // loop_footer_branch
                  %1806 = sbr.rel target = $region84
                $region89: #{tpu_custom_call.1} parent=81 // loop_exit
                  _
                %s1886 = sshrl.u32 %s1683, 5
                %s1887 = sand.u32 %s1683, 31
                %s1888 = smul.u32 %s1886, 32
                %s1889 = smul.u32 8, %s1888
                %s1890 = scalar_lea.vmem %s1676, %s1889 [#allocation6]
                %s1891 = smul.u32 8, %s1888
                %s1892 = scalar_lea.vmem %s1687, %s1891
                // While loop
                $region90: #{tpu_custom_call.1} parent=81 // loop_pre_header
                  _
                $region91: #{tpu_custom_call.1} parent=81 // loop_header
                  %s1894 = sphi 0, %s1896
                  %p1895 = scmp.ge.s32.totalorder %s1894, %s1887
                  %s1899 = sphi 0, %s1906
                  %s1900 = sphi %s1890, %s1909
                  %s1901 = sphi %s1892, %s1910
                $region92: #{tpu_custom_call.1} parent=81 // loop_header_branch
                  %1898 = sbr.rel (%p1895) target = $region96
                $region93: #{tpu_custom_call.1} parent=81 // loop_body
                  %v1902 = vld [vmem:[%s1900] sm:$0xff]
                  %1903 = vst [vmem:[%s1901] sm:$0xff] %v1902
                  %s1904 = sadd.s32 1, %s1899
                  %p1905 = scmp.ge.s32.totalorder %s1904, %s1887
                  %s1906 = scalar_select %p1905, 0, %s1904
                  %s1907 = smul.u32 %s1906, 8
                  %s1908 = smul.u32 %s1906, 8
                  %s1909 = scalar_lea.vmem %s1890, %s1907 [#allocation6]
                  %s1910 = scalar_lea.vmem %s1892, %s1908
                $region94: #{tpu_custom_call.1} parent=81 // loop_footer
                  %s1896 = sadd.s32 %s1894, 1
                $region95: #{tpu_custom_call.1} parent=81 // loop_footer_branch
                  %1893 = sbr.rel target = $region91
                $region96: #{tpu_custom_call.1} parent=81 // loop_exit
                  _
              $region82: #{tpu_custom_call.1} parent=59 // pred_fallthru
                _
              // Predicated region
              $region97: #{tpu_custom_call.1} parent=59 // pred_check
                _
              $region98: #{tpu_custom_call.1} parent=59 // pred_check_branch
                %1912 = sbr.rel target = $region100
              $region99: #{tpu_custom_call.1} parent=59 // pred_region
                _
              $region100: #{tpu_custom_call.1} parent=59 // pred_fallthru
                _
            $region60: #{tpu_custom_call.1} parent=55 // pred_fallthru
              _
            // Predicated region
            $region61: #{tpu_custom_call.1} parent=55 // pred_check
              _
            $region62: #{tpu_custom_call.1} parent=55 // pred_check_branch
              %1694 = sbr.rel target = $region64
            $region63: #{tpu_custom_call.1} parent=55 // pred_region
              %s1696 = ssub.s32 256, 1
              %s1697 = sshrl.u32 %s1683, 5
              // While loop
              $region65: #{tpu_custom_call.1} parent=63 // loop_pre_header
                _
              $region66: #{tpu_custom_call.1} parent=63 // loop_header
                %s1699 = sphi 0, %s1701
                %p1700 = scmp.ge.s32.totalorder %s1699, %s1697
                %s1704 = sphi 0, %s1773
                %s1705 = sphi %s1676, %s1776
                %s1706 = sphi %s1687, %s1777
              $region67: #{tpu_custom_call.1} parent=63 // loop_header_branch
                %1703 = sbr.rel (%p1700) target = $region71
              $region68: #{tpu_custom_call.1} parent=63 // loop_body
                %v1707 = vld [vmem:[%s1705] sm:%s1696]
                %1708 = vst [vmem:[%s1706] sm:%s1696] %v1707
                %v1709 = vld [vmem:[%s1705 + $0x8] sm:%s1696]
                %1710 = vst [vmem:[%s1706 + $0x8] sm:%s1696] %v1709
                %v1711 = vld [vmem:[%s1705 + $0x10] sm:%s1696]
                %1712 = vst [vmem:[%s1706 + $0x10] sm:%s1696] %v1711
                %v1713 = vld [vmem:[%s1705 + $0x18] sm:%s1696]
                %1714 = vst [vmem:[%s1706 + $0x18] sm:%s1696] %v1713
                %v1715 = vld [vmem:[%s1705 + $0x20] sm:%s1696]
                %1716 = vst [vmem:[%s1706 + $0x20] sm:%s1696] %v1715
                %v1717 = vld [vmem:[%s1705 + $0x28] sm:%s1696]
                %1718 = vst [vmem:[%s1706 + $0x28] sm:%s1696] %v1717
                %v1719 = vld [vmem:[%s1705 + $0x30] sm:%s1696]
                %1720 = vst [vmem:[%s1706 + $0x30] sm:%s1696] %v1719
                %v1721 = vld [vmem:[%s1705 + $0x38] sm:%s1696]
                %1722 = vst [vmem:[%s1706 + $0x38] sm:%s1696] %v1721
                %v1723 = vld [vmem:[%s1705 + $0x40] sm:%s1696]
                %1724 = vst [vmem:[%s1706 + $0x40] sm:%s1696] %v1723
                %v1725 = vld [vmem:[%s1705 + $0x48] sm:%s1696]
                %1726 = vst [vmem:[%s1706 + $0x48] sm:%s1696] %v1725
                %v1727 = vld [vmem:[%s1705 + $0x50] sm:%s1696]
                %1728 = vst [vmem:[%s1706 + $0x50] sm:%s1696] %v1727
                %v1729 = vld [vmem:[%s1705 + $0x58] sm:%s1696]
                %1730 = vst [vmem:[%s1706 + $0x58] sm:%s1696] %v1729
                %v1731 = vld [vmem:[%s1705 + $0x60] sm:%s1696]
                %1732 = vst [vmem:[%s1706 + $0x60] sm:%s1696] %v1731
                %v1733 = vld [vmem:[%s1705 + $0x68] sm:%s1696]
                %1734 = vst [vmem:[%s1706 + $0x68] sm:%s1696] %v1733
                %v1735 = vld [vmem:[%s1705 + $0x70] sm:%s1696]
                %1736 = vst [vmem:[%s1706 + $0x70] sm:%s1696] %v1735
                %v1737 = vld [vmem:[%s1705 + $0x78] sm:%s1696]
                %1738 = vst [vmem:[%s1706 + $0x78] sm:%s1696] %v1737
                %v1739 = vld [vmem:[%s1705 + $0x80] sm:%s1696]
                %1740 = vst [vmem:[%s1706 + $0x80] sm:%s1696] %v1739
                %v1741 = vld [vmem:[%s1705 + $0x88] sm:%s1696]
                %1742 = vst [vmem:[%s1706 + $0x88] sm:%s1696] %v1741
                %v1743 = vld [vmem:[%s1705 + $0x90] sm:%s1696]
                %1744 = vst [vmem:[%s1706 + $0x90] sm:%s1696] %v1743
                %v1745 = vld [vmem:[%s1705 + $0x98] sm:%s1696]
                %1746 = vst [vmem:[%s1706 + $0x98] sm:%s1696] %v1745
                %v1747 = vld [vmem:[%s1705 + $0xa0] sm:%s1696]
                %1748 = vst [vmem:[%s1706 + $0xa0] sm:%s1696] %v1747
                %v1749 = vld [vmem:[%s1705 + $0xa8] sm:%s1696]
                %1750 = vst [vmem:[%s1706 + $0xa8] sm:%s1696] %v1749
                %v1751 = vld [vmem:[%s1705 + $0xb0] sm:%s1696]
                %1752 = vst [vmem:[%s1706 + $0xb0] sm:%s1696] %v1751
                %v1753 = vld [vmem:[%s1705 + $0xb8] sm:%s1696]
                %1754 = vst [vmem:[%s1706 + $0xb8] sm:%s1696] %v1753
                %v1755 = vld [vmem:[%s1705 + $0xc0] sm:%s1696]
                %1756 = vst [vmem:[%s1706 + $0xc0] sm:%s1696] %v1755
                %v1757 = vld [vmem:[%s1705 + $0xc8] sm:%s1696]
                %1758 = vst [vmem:[%s1706 + $0xc8] sm:%s1696] %v1757
                %v1759 = vld [vmem:[%s1705 + $0xd0] sm:%s1696]
                %1760 = vst [vmem:[%s1706 + $0xd0] sm:%s1696] %v1759
                %v1761 = vld [vmem:[%s1705 + $0xd8] sm:%s1696]
                %1762 = vst [vmem:[%s1706 + $0xd8] sm:%s1696] %v1761
                %v1763 = vld [vmem:[%s1705 + $0xe0] sm:%s1696]
                %1764 = vst [vmem:[%s1706 + $0xe0] sm:%s1696] %v1763
                %v1765 = vld [vmem:[%s1705 + $0xe8] sm:%s1696]
                %1766 = vst [vmem:[%s1706 + $0xe8] sm:%s1696] %v1765
                %v1767 = vld [vmem:[%s1705 + $0xf0] sm:%s1696]
                %1768 = vst [vmem:[%s1706 + $0xf0] sm:%s1696] %v1767
                %v1769 = vld [vmem:[%s1705 + $0xf8] sm:%s1696]
                %1770 = vst [vmem:[%s1706 + $0xf8] sm:%s1696] %v1769
                %s1771 = sadd.s32 1, %s1704
                %p1772 = scmp.ge.s32.totalorder %s1771, %s1697
                %s1773 = scalar_select %p1772, 0, %s1771
                %s1774 = smul.u32 %s1773, 256
                %s1775 = smul.u32 %s1773, 256
                %s1776 = scalar_lea.vmem %s1676, %s1774 [#allocation6]
                %s1777 = scalar_lea.vmem %s1687, %s1775
              $region69: #{tpu_custom_call.1} parent=63 // loop_footer
                %s1701 = sadd.s32 %s1699, 1
              $region70: #{tpu_custom_call.1} parent=63 // loop_footer_branch
                %1698 = sbr.rel target = $region66
              $region71: #{tpu_custom_call.1} parent=63 // loop_exit
                _
              %s1778 = sshrl.u32 %s1683, 5
              %s1779 = sand.u32 %s1683, 31
              %s1780 = smul.u32 %s1778, 32
              %s1781 = smul.u32 8, %s1780
              %s1782 = scalar_lea.vmem %s1676, %s1781 [#allocation6]
              %s1783 = smul.u32 8, %s1780
              %s1784 = scalar_lea.vmem %s1687, %s1783
              // While loop
              $region72: #{tpu_custom_call.1} parent=63 // loop_pre_header
                _
              $region73: #{tpu_custom_call.1} parent=63 // loop_header
                %s1786 = sphi 0, %s1788
                %p1787 = scmp.ge.s32.totalorder %s1786, %s1779
                %s1791 = sphi 0, %s1798
                %s1792 = sphi %s1782, %s1801
                %s1793 = sphi %s1784, %s1802
              $region74: #{tpu_custom_call.1} parent=63 // loop_header_branch
                %1790 = sbr.rel (%p1787) target = $region78
              $region75: #{tpu_custom_call.1} parent=63 // loop_body
                %v1794 = vld [vmem:[%s1792] sm:%s1696]
                %1795 = vst [vmem:[%s1793] sm:%s1696] %v1794
                %s1796 = sadd.s32 1, %s1791
                %p1797 = scmp.ge.s32.totalorder %s1796, %s1779
                %s1798 = scalar_select %p1797, 0, %s1796
                %s1799 = smul.u32 %s1798, 8
                %s1800 = smul.u32 %s1798, 8
                %s1801 = scalar_lea.vmem %s1782, %s1799 [#allocation6]
                %s1802 = scalar_lea.vmem %s1784, %s1800
              $region76: #{tpu_custom_call.1} parent=63 // loop_footer
                %s1788 = sadd.s32 %s1786, 1
              $region77: #{tpu_custom_call.1} parent=63 // loop_footer_branch
                %1785 = sbr.rel target = $region73
              $region78: #{tpu_custom_call.1} parent=63 // loop_exit
                _
            $region64: #{tpu_custom_call.1} parent=55 // pred_fallthru
              _
          $region56: #{tpu_custom_call.1} parent=51 // pred_fallthru
            _
          %1913 = vnop
        $region52: #{tpu_custom_call.1} parent=39 // pred_fallthru
          _
      $region40: #{tpu_custom_call.1} parent=5 // pred_fallthru
        _
      %p1914 = scmp.le.s32.totalorder 2, %s15
      // Predicated region
      $region101: #{tpu_custom_call.1} parent=5 // pred_check
        %p1915 = pneg %p1914
      $region102: #{tpu_custom_call.1} parent=5 // pred_check_branch
        %1917 = sbr.rel (%p1915) target = $region104
      $region103: #{tpu_custom_call.1} parent=5 // pred_region
        %s1918 = ssub.s32 %s15, 2
        // Predicated region
        $region105: #{tpu_custom_call.1} parent=103 // pred_check
          %p1919 = pneg %p154
        $region106: #{tpu_custom_call.1} parent=103 // pred_check_branch
          %1921 = sbr.rel (%p1919) target = $region108
        $region107: #{tpu_custom_call.1} parent=103 // pred_region
          %s1922 = sand.u32 %s139, 1
          %s1923 = sand.u32 %s139, 1
          %s1924 = smul.addr %s1923, 256
          %s1925 = scalar_lea.vmem [#allocation6], %s1924
        $region108: #{tpu_custom_call.1} parent=103 // pred_fallthru
          _
      $region104: #{tpu_custom_call.1} parent=5 // pred_fallthru
        _
    $region6: #{tpu_custom_call.1} parent=1 // loop_footer
      %s19 = sadd.s32 1, %s15
    $region7: #{tpu_custom_call.1} parent=1 // loop_footer_branch
      %14 = sbr.rel target = $region3
    $region8: #{tpu_custom_call.1} parent=1 // loop_exit
      _
    %1926 = vsyncpa [#allocation3], 1
    %s1927 = scalar_lea.sflag [#allocation3], 1
    %1928 = vsyncpa %s1927, 1
    %1929 = vsyncpa [#allocation5], 1

</llo_original>
